<compile_context>
chip_gen: v7x
topology: tpu7x:2x2x1
jax: 0.10.0
libtpu: 0.0.40
codegen_flags: <defaults>
</compile_context>

<pallas_src>
import functools
import math

import jax
import jax.numpy as jnp
import numpy as np
from jax import lax
from jax.experimental import pallas as pl
from jax.experimental.pallas import tpu as pltpu


# Packed-parameter layouts (widths in units of Hp = roundup(H, 128)).  The
# packer and the kernel both derive their offsets from these tables.
W_LAYOUT = (("w_edge", 2), ("w_hh", 3), ("w_ih_in", 3), ("w_ih_out", 3),
            ("w_q2", 1), ("w_kv2", 2), ("w_o2", 1), ("w_hw_o", 1), ("w_hw_f", 1))
B_LAYOUT = (("b_edge", 2), ("b_iah", 1), ("b_oah", 1), ("b_ih", 3), ("b_hh", 3),
            ("b_q2", 1), ("b_kv2", 2), ("b_o2", 1), ("b_hw", 1))
W_COLS = sum(w for _, w in W_LAYOUT)     # 17
B_COLS = sum(w for _, w in B_LAYOUT)     # 15


def _round_up(x, m):
    return ((x + m - 1) // m) * m


def _unpack(ref, layout, Hp):
    """Load each packed segment via a static, 128-lane-aligned ref slice."""
    out, off = {}, 0
    for name, width in layout:
        out[name] = ref[:, off * Hp:(off + width) * Hp]
        off += width
    return out


def _sgnn_kernel(step, H, Hp, N, Bt, mm_dtype,
                 abd_in_ref, abd_out_ref, h_ref, g_ref, w_ref, b_ref,
                 out_h_ref, out_g_ref):
    M = Bt * N
    scale = 1.0 / math.sqrt(H)          # attention scale uses the true head dim

    W = _unpack(w_ref, W_LAYOUT, Hp)    # weights, already mm_dtype
    BI = _unpack(b_ref, B_LAYOUT, Hp)   # biases, float32

    a_in = abd_in_ref[...]              # (M, M) block-diagonal adjacency (mm_dtype)
    a_out = abd_out_ref[...]

    def mm(x_mm, w_name, b_name=None):
        y = jnp.dot(x_mm, W[w_name], preferred_element_type=jnp.float32)
        if b_name is not None:
            y = y + BI[b_name]
        return y

    def cell(hidden, g):
        hid_mm = hidden.astype(mm_dtype)            # cast once, reused below

        # --- graph message passing: block-diag adjacency => 2 big MXU matmuls ---
        edge = mm(hid_mm, "w_edge", "b_edge")       # (M, 2Hp) = [e_in | e_out]
        msg_in = jnp.dot(a_in, edge[:, :Hp].astype(mm_dtype),
                         preferred_element_type=jnp.float32) + BI["b_iah"]
        msg_out = jnp.dot(a_out, edge[:, Hp:].astype(mm_dtype),
                          preferred_element_type=jnp.float32) + BI["b_oah"]

        # --- GRU-style gates (split-K matmuls instead of concat([in, out])) ---
        gi = (mm(msg_in.astype(mm_dtype), "w_ih_in") +
              mm(msg_out.astype(mm_dtype), "w_ih_out") + BI["b_ih"])   # (M, 3Hp)
        gh = mm(hid_mm, "w_hh", "b_hh")                                # (M, 3Hp)
        ri = jax.nn.sigmoid(gi[:, :2 * Hp] + gh[:, :2 * Hp])
        resetgate, inputgate = ri[:, :Hp], ri[:, Hp:]
        newgate = jnp.tanh(gi[:, 2 * Hp:] + resetgate * gh[:, 2 * Hp:])
        hy = newgate + inputgate * (hidden - newgate)                  # (M, Hp)

        # --- attn1: single key => softmax weight is exactly 1.0, so its q/k
        # projections are dead; the update is hy + 1*g - 1*hy. ---
        hy3 = hy.reshape(Bt, N, Hp)
        hy_new = (hy3 + (g.reshape(Bt, 1, Hp) - hy3)).reshape(M, Hp)

        # --- attn2 (one query per batch): scores / softmax / weighted sum on
        # the VPU + XLU (no M=1 MXU matmuls).  N is small and static, so the
        # softmax over the key axis is a statically unrolled max/sum. ---
        q2 = mm(g.astype(mm_dtype), "w_q2", "b_q2")                    # (Bt, Hp)
        kv = mm(hy_new.astype(mm_dtype), "w_kv2", "b_kv2")             # (M, 2Hp)
        k2 = kv[:, :Hp].reshape(Bt, N, Hp)
        v2 = kv[:, Hp:].reshape(Bt, N, Hp)
        s2 = jnp.sum(q2.reshape(Bt, 1, Hp) * k2,
                     axis=-1, keepdims=True) * scale                   # (Bt, N, 1)
        m2 = s2[:, 0:1]
        for n in range(1, N):
            m2 = jnp.maximum(m2, s2[:, n:n + 1])
        p2 = jnp.exp(s2 - m2)
        den = p2[:, 0:1]
        for n in range(1, N):
            den = den + p2[:, n:n + 1]
        w2 = p2 / den                                                  # (Bt, N, 1)
        ctx3 = w2[:, 0:1] * v2[:, 0:1]
        for n in range(1, N):
            ctx3 = ctx3 + w2[:, n:n + 1] * v2[:, n:n + 1]
        g_new = mm(ctx3.reshape(Bt, Hp).astype(mm_dtype), "w_o2", "b_o2")
        return hy_new, g_new

    g0 = g_ref[...].reshape(Bt, Hp)
    if step <= 3:                       # short fixed trip-counts: static unroll
        hidden, g = h_ref[...], g0
        for _ in range(step):
            hidden, g = cell(hidden, g)
    else:                               # longer: fori_loop bounds live ranges
        hidden, g = lax.fori_loop(0, step, lambda _, c: cell(c[0], c[1]),
                                  (h_ref[...], g0))

    # --- highway: split-K matmuls on [orig | final]; hidden0 re-read from the
    # VMEM ref so it is not kept live across the step loop. ---
    hidden0 = h_ref[...]
    gate = jax.nn.sigmoid(mm(hidden0.astype(mm_dtype), "w_hw_o") +
                          mm(hidden.astype(mm_dtype), "w_hw_f") + BI["b_hw"])
    out_h_ref[...] = hidden + gate * (hidden0 - hidden)    # full-lane-width store
    out_g_ref[...] = g.reshape(Bt, 1, Hp)


def _block_diag(A_dir, Bt):
    """(B, N, N) -> (B//Bt * Bt*N, Bt*N): per-grid-block block-diagonal adjacency."""
    B, N, _ = A_dir.shape
    G, M = B // Bt, Bt * N
    a = A_dir.reshape(G, Bt, N, N)
    eye = jnp.eye(Bt, dtype=A_dir.dtype)
    bd = a[:, :, :, None, :] * eye[None, :, None, :, None]   # (G, Bt, N, Bt, N)
    return bd.reshape(G * M, M)


def _choose_block_batch(B, N, Hp, mm_bytes):
    """Batch elements per grid step: ~256 flat rows to fill the MXU M dim
    (kept at 256 -- not 512 -- so the block-diagonal adjacency stays small),
    capped by a padded-footprint VMEM estimate that is safe on v7x (64 MiB),
    and capped so the grid has >=2 steps (both v7x TensorCores get work)."""
    target = max(1, -(-256 // N))

    def vmem_est(bt):
        M = bt * N
        Ml = _round_up(M, 128)                      # lane padding of the adj last dim
        adj = 2 * 2 * M * Ml * mm_bytes             # 2 directions, double-buffered
        act = 2 * (M * Hp * 4 + Hp * 4)             # hidden + g inputs, double-buffered
        out = 2 * (M * Hp * 4 + Hp * 4)
        tmp = 12 * M * Hp * 4                       # edge/msg/gi/gh/kv/... temporaries
        return adj + act + out + tmp

    bt = max(1, min(B, target))
    while bt > 1 and vmem_est(bt) > 20 * 1024 * 1024:
        bt -= 1
    if B >= 2:
        bt = min(bt, B // 2)                        # grid >= 2 for v7x's 2 TCs
    bt = max(bt, 1)
    while bt > 1 and (B % bt != 0 or (bt * N) % 8 != 0):
        bt -= 1
    if B % bt != 0 or ((bt * N) % 8 != 0 and bt * N != B * N):
        bt = B                                      # full-array blocks are always legal
    return bt


def sgnn_forward(A, hidden, mask, alias_inputs, g_emb, packed_params, step=1,
                 block_batch=None, matmul_dtype=jnp.bfloat16):
    # mask / alias_inputs are accepted for signature parity with the PyTorch
    # module but are unused by its forward pass.
    del mask, alias_inputs
    B, N, H = hidden.shape
    Hp = _round_up(H, 128)
    assert A.shape == (B, N, 2 * N) and g_emb.shape == (B, 1, H)

    w_slab, b_slab = packed_params
    assert w_slab.shape == (Hp, W_COLS * Hp) and b_slab.shape == (1, B_COLS * Hp)

    mm_bytes = jnp.dtype(matmul_dtype).itemsize
    Bt = _choose_block_batch(B, N, Hp, mm_bytes) if block_batch is None else block_batch
    assert B % Bt == 0
    G, M = B // Bt, Bt * N

    # Block-diagonal adjacency (built HBM-side, shipped in the MXU dtype) so
    # message passing is one (M, M) @ (M, Hp) matmul per direction in-kernel.
    abd_in = _block_diag(A[:, :, :N], Bt).astype(matmul_dtype)     # (G*M, M)
    abd_out = _block_diag(A[:, :, N:], Bt).astype(matmul_dtype)    # (G*M, M)

    # Zero-pad hidden / g to the 128-lane-aligned width Hp: every in-kernel
    # lane slice is vreg-aligned and all output stores are lane-dense.
    hidden_flat = jnp.pad(hidden.reshape(B * N, H), ((0, 0), (0, Hp - H)))
    g_pad = jnp.pad(g_emb, ((0, 0), (0, 0), (0, Hp - H)))

    w_slab = w_slab.astype(matmul_dtype)           # weights at MXU precision
    b_slab = b_slab.astype(jnp.float32)            # biases stay f32

    kernel = functools.partial(_sgnn_kernel, step, H, Hp, N, Bt, matmul_dtype)

    out_h, out_g = pl.pallas_call(
        kernel,
        grid=(G,),
        in_specs=[
            pl.BlockSpec((M, M), lambda i: (i, 0)),          # block-diag A_in
            pl.BlockSpec((M, M), lambda i: (i, 0)),          # block-diag A_out
            pl.BlockSpec((M, Hp), lambda i: (i, 0)),         # node embeddings (flat, padded)
            pl.BlockSpec((Bt, 1, Hp), lambda i: (i, 0, 0)),  # star embedding
            pl.BlockSpec(w_slab.shape, lambda i: (0, 0)),    # grid-invariant weight slab
            pl.BlockSpec(b_slab.shape, lambda i: (0, 0)),    # grid-invariant bias slab
        ],
        out_specs=[
            pl.BlockSpec((M, Hp), lambda i: (i, 0)),
            pl.BlockSpec((Bt, 1, Hp), lambda i: (i, 0, 0)),
        ],
        out_shape=[
            jax.ShapeDtypeStruct((B * N, Hp), jnp.float32),
            jax.ShapeDtypeStruct((B, 1, Hp), jnp.float32),
        ],
        compiler_params=pltpu.CompilerParams(
            dimension_semantics=("parallel",),     # batch blocks are independent
            vmem_limit_bytes=48 * 1024 * 1024,     # headroom under v7x's 64 MiB
        ),
    )(abd_in, abd_out, hidden_flat, g_pad, w_slab, b_slab)
    return out_h[:, :H].reshape(B, N, H), out_g[:, :, :H]


# ------------------------- parameter setup (deterministic) -------------------------

def init_torch_params(key, H):
    """PyTorch-shaped parameters (weights are (out, in), biases 1-D)."""
    names_shapes = [
        ("w_ih", (3 * H, 2 * H)), ("w_hh", (3 * H, H)),
        ("b_ih", (3 * H,)), ("b_hh", (3 * H,)),
        ("b_iah", (H,)), ("b_oah", (H,)),
        ("lin_in_w", (H, H)), ("lin_in_b", (H,)),
        ("lin_out_w", (H, H)), ("lin_out_b", (H,)),
        ("attn1_in_w", (3 * H, H)), ("attn1_in_b", (3 * H,)),
        ("attn2_in_w", (3 * H, H)), ("attn2_in_b", (3 * H,)),
        ("attn2_out_w", (H, H)), ("attn2_out_b", (H,)),
        ("hw_w", (H, 2 * H)), ("hw_b", (H,)),
    ]
    keys = jax.random.split(key, len(names_shapes))
    stdv = 1.0 / math.sqrt(H)
    return {n: jax.random.uniform(k, s, jnp.float32, -stdv, stdv)
            for (n, s), k in zip(names_shapes, keys)}
    # linear_edge_f and attn1's value/output projections exist in the PyTorch
    # module but are never used by forward(), so they are omitted.


def _pad_w(w_t, H, Hp, n_chunks):
    """(H, n*H) transposed weight -> (Hp, n*Hp), zero-padded per output chunk."""
    out = jnp.zeros((Hp, n_chunks * Hp), jnp.float32)
    for c in range(n_chunks):
        out = out.at[:H, c * Hp:c * Hp + H].set(w_t[:, c * H:(c + 1) * H])
    return out


def _pad_b(b, H, Hp, n_chunks):
    """length-(n*H) bias -> (1, n*Hp), zero-padded per chunk."""
    b = jnp.asarray(b, jnp.float32).reshape(n_chunks, H)
    out = jnp.zeros((1, n_chunks * Hp), jnp.float32)
    for c in range(n_chunks):
        out = out.at[0, c * Hp:c * Hp + H].set(b[c])
    return out


def pack_params(tp, H):
    """Pre-transpose, fuse, 128-lane-pad and pack all used weights into one
    weight slab (Hp, 17*Hp) and one bias slab (1, 15*Hp)."""
    Hp = _round_up(H, 128)
    T = lambda x: jnp.asarray(x, jnp.float32).T
    a2w, a2b = tp["attn2_in_w"], tp["attn2_in_b"]
    w_ih_T = T(tp["w_ih"])               # (2H, 3H): rows [in-features | out-features]
    hw_T = T(tp["hw_w"])                 # (2H, H):  rows [orig | final]
    w_pieces = {
        "w_edge":   _pad_w(jnp.concatenate([T(tp["lin_in_w"]), T(tp["lin_out_w"])], axis=1), H, Hp, 2),
        "w_hh":     _pad_w(T(tp["w_hh"]), H, Hp, 3),
        "w_ih_in":  _pad_w(w_ih_T[:H], H, Hp, 3),
        "w_ih_out": _pad_w(w_ih_T[H:], H, Hp, 3),
        "w_q2":     _pad_w(T(a2w[:H]), H, Hp, 1),
        "w_kv2":    _pad_w(jnp.concatenate([T(a2w[H:2 * H]), T(a2w[2 * H:])], axis=1), H, Hp, 2),
        "w_o2":     _pad_w(T(tp["attn2_out_w"]), H, Hp, 1),
        "w_hw_o":   _pad_w(hw_T[:H], H, Hp, 1),
        "w_hw_f":   _pad_w(hw_T[H:], H, Hp, 1),
    }
    b_pieces = {
        "b_edge": _pad_b(jnp.concatenate([tp["lin_in_b"], tp["lin_out_b"]]), H, Hp, 2),
        "b_iah":  _pad_b(tp["b_iah"], H, Hp, 1),
        "b_oah":  _pad_b(tp["b_oah"], H, Hp, 1),
        "b_ih":   _pad_b(tp["b_ih"], H, Hp, 3),
        "b_hh":   _pad_b(tp["b_hh"], H, Hp, 3),
        "b_q2":   _pad_b(a2b[:H], H, Hp, 1),
        "b_kv2":  _pad_b(a2b[H:], H, Hp, 2),
        "b_o2":   _pad_b(tp["attn2_out_b"], H, Hp, 1),
        "b_hw":   _pad_b(tp["hw_b"], H, Hp, 1),
    }
    w_slab = jnp.concatenate([w_pieces[n] for n, _ in W_LAYOUT], axis=1)
    b_slab = jnp.concatenate([b_pieces[n] for n, _ in B_LAYOUT], axis=1)
    assert w_slab.shape == (Hp, W_COLS * Hp) and b_slab.shape == (1, B_COLS * Hp)
    return w_slab, b_slab


# ---------------- pure-JAX reference (mirrors the PyTorch module) ----------------

def sgnn_reference(A, hidden, g_emb, tp, step=1):
    H = hidden.shape[-1]
    N = A.shape[1]
    scale = 1.0 / math.sqrt(H)

    def linear(x, w, b):
        return x @ w.T + b

    hidden_orig = hidden
    for _ in range(step):
        input_in = A[:, :, :N] @ linear(hidden, tp["lin_in_w"], tp["lin_in_b"]) + tp["b_iah"]
        input_out = A[:, :, N:2 * N] @ linear(hidden, tp["lin_out_w"], tp["lin_out_b"]) + tp["b_oah"]
        inputs = jnp.concatenate([input_in, input_out], axis=2)
        gi = linear(inputs, tp["w_ih"], tp["b_ih"])
        gh = linear(hidden, tp["w_hh"], tp["b_hh"])
        i_r, i_i, i_n = jnp.split(gi, 3, axis=2)
        h_r, h_i, h_n = jnp.split(gh, 3, axis=2)
        resetgate = jax.nn.sigmoid(i_r + h_r)
        inputgate = jax.nn.sigmoid(i_i + h_i)
        newgate = jnp.tanh(i_n + resetgate * h_n)
        hy = newgate + inputgate * (hidden - newgate)

        q1 = linear(hy, tp["attn1_in_w"][:H], tp["attn1_in_b"][:H])
        k1 = linear(g_emb, tp["attn1_in_w"][H:2 * H], tp["attn1_in_b"][H:2 * H])
        s1 = jnp.einsum("bld,bsd->bls", q1, k1) * scale          # (B, N, 1)
        w1 = jax.nn.softmax(s1, axis=-1)                         # == 1 (single key)
        hy_new = hy + w1 * g_emb - w1 * hy

        q2 = linear(g_emb, tp["attn2_in_w"][:H], tp["attn2_in_b"][:H])
        k2 = linear(hy_new, tp["attn2_in_w"][H:2 * H], tp["attn2_in_b"][H:2 * H])
        v2 = linear(hy_new, tp["attn2_in_w"][2 * H:], tp["attn2_in_b"][2 * H:])
        s2 = jnp.einsum("bld,bsd->bls", q2, k2) * scale          # (B, 1, N)
        w2 = jax.nn.softmax(s2, axis=-1)
        ctx = jnp.einsum("bls,bsd->bld", w2, v2)
        g_emb = linear(ctx, tp["attn2_out_w"], tp["attn2_out_b"])
        hidden = hy_new

    gate = jax.nn.sigmoid(linear(jnp.concatenate([hidden_orig, hidden], axis=2),
                                 tp["hw_w"], tp["hw_b"]))
    return hidden + gate * hidden_orig - gate * hidden, g_emb


if __name__ == "__main__":
    B, N, H = 2, 8, 32
    key = jax.random.PRNGKey(0)
    ka, kh, kg, kp = jax.random.split(key, 4)

    A = jax.random.uniform(ka, (B, N, 2 * N), jnp.float32)
    hidden = jax.random.normal(kh, (B, N, H), jnp.float32)
    g_emb = jax.random.normal(kg, (B, 1, H), jnp.float32)
    mask = jnp.ones((B, N), jnp.float32)          # unused by forward
    alias_inputs = jnp.zeros((B, N), jnp.int32)   # unused by forward

    torch_params = init_torch_params(kp, H)
    packed = pack_params(torch_params, H)

    with jax.default_matmul_precision("float32"):
        ref_h1, ref_g1 = sgnn_reference(A, hidden, g_emb, torch_params, step=1)
        ref_h2, ref_g2 = sgnn_reference(A, hidden, g_emb, torch_params, step=2)

    # 1) f32-MXU path, step=1: tight check against the f32 reference.
    out_h, out_g = sgnn_forward(A, hidden, mask, alias_inputs, g_emb, packed,
                                step=1, matmul_dtype=jnp.float32)
    jax.block_until_ready((out_h, out_g))
    np.testing.assert_allclose(np.asarray(out_h), np.asarray(ref_h1), rtol=2e-3, atol=2e-3)
    np.testing.assert_allclose(np.asarray(out_g), np.asarray(ref_g1), rtol=2e-3, atol=2e-3)

    # 2) f32 path, step=2: exercises the multi-step carry.
    out_h2, out_g2 = sgnn_forward(A, hidden, mask, alias_inputs, g_emb, packed,
                                  step=2, matmul_dtype=jnp.float32)
    jax.block_until_ready((out_h2, out_g2))
    np.testing.assert_allclose(np.asarray(out_h2), np.asarray(ref_h2), rtol=2e-3, atol=2e-3)
    np.testing.assert_allclose(np.asarray(out_g2), np.asarray(ref_g2), rtol=2e-3, atol=2e-3)

    # 3) bf16-operand / f32-accumulate fast path (native MXU dtype on v5e/v6e/v7x);
    #    looser tolerance only to absorb bf16 operand rounding.
    out_h16, out_g16 = sgnn_forward(A, hidden, mask, alias_inputs, g_emb, packed,
                                    step=1, matmul_dtype=jnp.bfloat16)
    jax.block_until_ready((out_h16, out_g16))
    np.testing.assert_allclose(np.asarray(out_h16), np.asarray(ref_h1), rtol=3e-2, atol=3e-2)
    np.testing.assert_allclose(np.asarray(out_g16), np.asarray(ref_g1), rtol=3e-2, atol=3e-2)

    print("KERNEL_OK")
</pallas_src>

<mosaic_0001>
module attributes {stable_mosaic.version = 11 : i64} {
  func.func @_sgnn_kernel(%arg0: i32, %arg1: memref<8x8xf32, #tpu.memory_space<vmem>>, %arg2: memref<8x8xf32, #tpu.memory_space<vmem>>, %arg3: memref<8x128xf32, #tpu.memory_space<vmem>>, %arg4: memref<1x1x128xf32, #tpu.memory_space<vmem>>, %arg5: memref<128x2176xf32, #tpu.memory_space<vmem>>, %arg6: memref<1x1920xf32, #tpu.memory_space<vmem>>, %arg7: memref<8x128xf32, #tpu.memory_space<vmem>>, %arg8: memref<1x1x128xf32, #tpu.memory_space<vmem>>) attributes {dimension_semantics = [#tpu.dimension_semantics<parallel>], iteration_bounds = array<i64: 2>, scalar_prefetch = 0 : i64, scratch_operands = 0 : i64, tpu.core_type = #tpu.core_type<tc>, window_params = [{transform_indices = @transform_0, window_bounds = array<i64: 8, 8>}, {transform_indices = @transform_1, window_bounds = array<i64: 8, 8>}, {transform_indices = @transform_2, window_bounds = array<i64: 8, 128>}, {transform_indices = @transform_3, window_bounds = array<i64: 1, 1, 128>}, {pipeline_mode = #tpu.pipeline_mode<synchronous>, transform_indices = @transform_4, window_bounds = array<i64: 128, 2176>}, {pipeline_mode = #tpu.pipeline_mode<synchronous>, transform_indices = @transform_5, window_bounds = array<i64: 1, 1920>}, {transform_indices = @transform_6, window_bounds = array<i64: 8, 128>}, {transform_indices = @transform_7, window_bounds = array<i64: 1, 1, 128>}]} {
    %c0 = arith.constant 0 : index
    %c0_0 = arith.constant 0 : index
    %0 = vector.load %arg5[%c0, %c0_0] : memref<128x2176xf32, #tpu.memory_space<vmem>>, vector<128x256xf32>
    %c0_1 = arith.constant 0 : index
    %c256 = arith.constant 256 : index
    %1 = vector.load %arg5[%c0_1, %c256] : memref<128x2176xf32, #tpu.memory_space<vmem>>, vector<128x384xf32>
    %c0_2 = arith.constant 0 : index
    %c640 = arith.constant 640 : index
    %2 = vector.load %arg5[%c0_2, %c640] : memref<128x2176xf32, #tpu.memory_space<vmem>>, vector<128x384xf32>
    %c0_3 = arith.constant 0 : index
    %c1024 = arith.constant 1024 : index
    %3 = vector.load %arg5[%c0_3, %c1024] : memref<128x2176xf32, #tpu.memory_space<vmem>>, vector<128x384xf32>
    %c0_4 = arith.constant 0 : index
    %c1408 = arith.constant 1408 : index
    %4 = vector.load %arg5[%c0_4, %c1408] : memref<128x2176xf32, #tpu.memory_space<vmem>>, vector<128x128xf32>
    %c0_5 = arith.constant 0 : index
    %c1536 = arith.constant 1536 : index
    %5 = vector.load %arg5[%c0_5, %c1536] : memref<128x2176xf32, #tpu.memory_space<vmem>>, vector<128x256xf32>
    %c0_6 = arith.constant 0 : index
    %c1792 = arith.constant 1792 : index
    %6 = vector.load %arg5[%c0_6, %c1792] : memref<128x2176xf32, #tpu.memory_space<vmem>>, vector<128x128xf32>
    %c0_7 = arith.constant 0 : index
    %c1920 = arith.constant 1920 : index
    %7 = vector.load %arg5[%c0_7, %c1920] : memref<128x2176xf32, #tpu.memory_space<vmem>>, vector<128x128xf32>
    %c0_8 = arith.constant 0 : index
    %c2048 = arith.constant 2048 : index
    %8 = vector.load %arg5[%c0_8, %c2048] : memref<128x2176xf32, #tpu.memory_space<vmem>>, vector<128x128xf32>
    %c0_9 = arith.constant 0 : index
    %c0_10 = arith.constant 0 : index
    %9 = vector.load %arg6[%c0_9, %c0_10] : memref<1x1920xf32, #tpu.memory_space<vmem>>, vector<1x256xf32>
    %c0_11 = arith.constant 0 : index
    %c256_12 = arith.constant 256 : index
    %10 = vector.load %arg6[%c0_11, %c256_12] : memref<1x1920xf32, #tpu.memory_space<vmem>>, vector<1x128xf32>
    %c0_13 = arith.constant 0 : index
    %c384 = arith.constant 384 : index
    %11 = vector.load %arg6[%c0_13, %c384] : memref<1x1920xf32, #tpu.memory_space<vmem>>, vector<1x128xf32>
    %c0_14 = arith.constant 0 : index
    %c512 = arith.constant 512 : index
    %12 = vector.load %arg6[%c0_14, %c512] : memref<1x1920xf32, #tpu.memory_space<vmem>>, vector<1x384xf32>
    %c0_15 = arith.constant 0 : index
    %c896 = arith.constant 896 : index
    %13 = vector.load %arg6[%c0_15, %c896] : memref<1x1920xf32, #tpu.memory_space<vmem>>, vector<1x384xf32>
    %c0_16 = arith.constant 0 : index
    %c1280 = arith.constant 1280 : index
    %14 = vector.load %arg6[%c0_16, %c1280] : memref<1x1920xf32, #tpu.memory_space<vmem>>, vector<1x128xf32>
    %c0_17 = arith.constant 0 : index
    %c1408_18 = arith.constant 1408 : index
    %15 = vector.load %arg6[%c0_17, %c1408_18] : memref<1x1920xf32, #tpu.memory_space<vmem>>, vector<1x256xf32>
    %c0_19 = arith.constant 0 : index
    %c1664 = arith.constant 1664 : index
    %16 = vector.load %arg6[%c0_19, %c1664] : memref<1x1920xf32, #tpu.memory_space<vmem>>, vector<1x128xf32>
    %c0_20 = arith.constant 0 : index
    %c1792_21 = arith.constant 1792 : index
    %17 = vector.load %arg6[%c0_20, %c1792_21] : memref<1x1920xf32, #tpu.memory_space<vmem>>, vector<1x128xf32>
    %c0_22 = arith.constant 0 : index
    %c0_23 = arith.constant 0 : index
    %18 = vector.load %arg1[%c0_22, %c0_23] : memref<8x8xf32, #tpu.memory_space<vmem>>, vector<8x8xf32>
    %c0_24 = arith.constant 0 : index
    %c0_25 = arith.constant 0 : index
    %19 = vector.load %arg2[%c0_24, %c0_25] : memref<8x8xf32, #tpu.memory_space<vmem>>, vector<8x8xf32>
    %c0_26 = arith.constant 0 : index
    %c0_27 = arith.constant 0 : index
    %c0_28 = arith.constant 0 : index
    %20 = vector.load %arg4[%c0_26, %c0_27, %c0_28] : memref<1x1x128xf32, #tpu.memory_space<vmem>>, vector<1x1x128xf32>
    %21 = vector.shape_cast %20 : vector<1x1x128xf32> to vector<1x128xf32>
    %c0_29 = arith.constant 0 : index
    %c0_30 = arith.constant 0 : index
    %22 = vector.load %arg3[%c0_29, %c0_30] : memref<8x128xf32, #tpu.memory_space<vmem>>, vector<8x128xf32>
    %cst = arith.constant dense<0.000000e+00> : vector<8x256xf32>
    %23 = tpu.matmul %22, %0, %cst {dimension_numbers = #tpu.dot_dimension_numbers<[1], [0], [0], [1], [0, 0, 1, 1], [], []>} : vector<8x128xf32>, vector<128x256xf32>, vector<8x256xf32> -> vector<8x256xf32>
    %24 = vector.broadcast %9 : vector<1x256xf32> to vector<8x256xf32>
    %25 = arith.addf %23, %24 : vector<8x256xf32>
    %26 = vector.extract_strided_slice %25 {offsets = [0, 0], sizes = [8, 128], strides = [1, 1]} : vector<8x256xf32> to vector<8x128xf32>
    %cst_31 = arith.constant dense<0.000000e+00> : vector<8x128xf32>
    %27 = tpu.matmul %18, %26, %cst_31 {dimension_numbers = #tpu.dot_dimension_numbers<[1], [0], [0], [1], [0, 0, 1, 1], [], []>} : vector<8x8xf32>, vector<8x128xf32>, vector<8x128xf32> -> vector<8x128xf32>
    %28 = vector.broadcast %10 : vector<1x128xf32> to vector<8x128xf32>
    %29 = arith.addf %27, %28 : vector<8x128xf32>
    %30 = vector.extract_strided_slice %25 {offsets = [0, 128], sizes = [8, 128], strides = [1, 1]} : vector<8x256xf32> to vector<8x128xf32>
    %cst_32 = arith.constant dense<0.000000e+00> : vector<8x128xf32>
    %31 = tpu.matmul %19, %30, %cst_32 {dimension_numbers = #tpu.dot_dimension_numbers<[1], [0], [0], [1], [0, 0, 1, 1], [], []>} : vector<8x8xf32>, vector<8x128xf32>, vector<8x128xf32> -> vector<8x128xf32>
    %32 = vector.broadcast %11 : vector<1x128xf32> to vector<8x128xf32>
    %33 = arith.addf %31, %32 : vector<8x128xf32>
    %cst_33 = arith.constant dense<0.000000e+00> : vector<8x384xf32>
    %34 = tpu.matmul %29, %2, %cst_33 {dimension_numbers = #tpu.dot_dimension_numbers<[1], [0], [0], [1], [0, 0, 1, 1], [], []>} : vector<8x128xf32>, vector<128x384xf32>, vector<8x384xf32> -> vector<8x384xf32>
    %cst_34 = arith.constant dense<0.000000e+00> : vector<8x384xf32>
    %35 = tpu.matmul %33, %3, %cst_34 {dimension_numbers = #tpu.dot_dimension_numbers<[1], [0], [0], [1], [0, 0, 1, 1], [], []>} : vector<8x128xf32>, vector<128x384xf32>, vector<8x384xf32> -> vector<8x384xf32>
    %36 = arith.addf %34, %35 : vector<8x384xf32>
    %37 = vector.broadcast %12 : vector<1x384xf32> to vector<8x384xf32>
    %38 = arith.addf %36, %37 : vector<8x384xf32>
    %cst_35 = arith.constant dense<0.000000e+00> : vector<8x384xf32>
    %39 = tpu.matmul %22, %1, %cst_35 {dimension_numbers = #tpu.dot_dimension_numbers<[1], [0], [0], [1], [0, 0, 1, 1], [], []>} : vector<8x128xf32>, vector<128x384xf32>, vector<8x384xf32> -> vector<8x384xf32>
    %40 = vector.broadcast %13 : vector<1x384xf32> to vector<8x384xf32>
    %41 = arith.addf %39, %40 : vector<8x384xf32>
    %42 = vector.extract_strided_slice %38 {offsets = [0, 0], sizes = [8, 256], strides = [1, 1]} : vector<8x384xf32> to vector<8x256xf32>
    %43 = vector.extract_strided_slice %41 {offsets = [0, 0], sizes = [8, 256], strides = [1, 1]} : vector<8x384xf32> to vector<8x256xf32>
    %44 = arith.addf %42, %43 : vector<8x256xf32>
    %45 = arith.negf %44 : vector<8x256xf32>
    %46 = math.exp %45 : vector<8x256xf32>
    %cst_36 = arith.constant 1.000000e+00 : f32
    %47 = vector.broadcast %cst_36 : f32 to vector<8x256xf32>
    %48 = arith.addf %47, %46 : vector<8x256xf32>
    %49 = arith.divf %47, %48 : vector<8x256xf32>
    %50 = vector.extract_strided_slice %49 {offsets = [0, 0], sizes = [8, 128], strides = [1, 1]} : vector<8x256xf32> to vector<8x128xf32>
    %51 = vector.extract_strided_slice %49 {offsets = [0, 128], sizes = [8, 128], strides = [1, 1]} : vector<8x256xf32> to vector<8x128xf32>
    %52 = vector.extract_strided_slice %38 {offsets = [0, 256], sizes = [8, 128], strides = [1, 1]} : vector<8x384xf32> to vector<8x128xf32>
    %53 = vector.extract_strided_slice %41 {offsets = [0, 256], sizes = [8, 128], strides = [1, 1]} : vector<8x384xf32> to vector<8x128xf32>
    %54 = arith.mulf %50, %53 : vector<8x128xf32>
    %55 = arith.addf %52, %54 : vector<8x128xf32>
    %56 = math.tanh %55 : vector<8x128xf32>
    %57 = arith.subf %22, %56 : vector<8x128xf32>
    %58 = arith.mulf %51, %57 : vector<8x128xf32>
    %59 = arith.addf %56, %58 : vector<8x128xf32>
    %60 = vector.shape_cast %59 : vector<8x128xf32> to vector<1x8x128xf32>
    %61 = vector.shape_cast %21 : vector<1x128xf32> to vector<1x1x128xf32>
    %62 = vector.broadcast %61 : vector<1x1x128xf32> to vector<1x8x128xf32>
    %63 = arith.subf %62, %60 : vector<1x8x128xf32>
    %64 = arith.addf %60, %63 : vector<1x8x128xf32>
    %65 = vector.shape_cast %64 : vector<1x8x128xf32> to vector<8x128xf32>
    %cst_37 = arith.constant dense<0.000000e+00> : vector<1x128xf32>
    %66 = tpu.matmul %21, %4, %cst_37 {dimension_numbers = #tpu.dot_dimension_numbers<[1], [0], [0], [1], [0, 0, 1, 1], [], []>} : vector<1x128xf32>, vector<128x128xf32>, vector<1x128xf32> -> vector<1x128xf32>
    %67 = arith.addf %66, %14 : vector<1x128xf32>
    %cst_38 = arith.constant dense<0.000000e+00> : vector<8x256xf32>
    %68 = tpu.matmul %65, %5, %cst_38 {dimension_numbers = #tpu.dot_dimension_numbers<[1], [0], [0], [1], [0, 0, 1, 1], [], []>} : vector<8x128xf32>, vector<128x256xf32>, vector<8x256xf32> -> vector<8x256xf32>
    %69 = vector.broadcast %15 : vector<1x256xf32> to vector<8x256xf32>
    %70 = arith.addf %68, %69 : vector<8x256xf32>
    %71 = vector.extract_strided_slice %70 {offsets = [0, 0], sizes = [8, 128], strides = [1, 1]} : vector<8x256xf32> to vector<8x128xf32>
    %72 = vector.shape_cast %71 : vector<8x128xf32> to vector<1x8x128xf32>
    %73 = vector.extract_strided_slice %70 {offsets = [0, 128], sizes = [8, 128], strides = [1, 1]} : vector<8x256xf32> to vector<8x128xf32>
    %74 = vector.shape_cast %73 : vector<8x128xf32> to vector<1x8x128xf32>
    %75 = vector.shape_cast %67 : vector<1x128xf32> to vector<1x1x128xf32>
    %76 = vector.broadcast %75 : vector<1x1x128xf32> to vector<1x8x128xf32>
    %77 = arith.mulf %76, %72 : vector<1x8x128xf32>
    %cst_39 = arith.constant dense<0.000000e+00> : vector<1x8xf32>
    %78 = vector.multi_reduction <add>, %77, %cst_39 [2] : vector<1x8x128xf32> to vector<1x8xf32>
    %79 = vector.shape_cast %78 : vector<1x8xf32> to vector<1x8x1xf32>
    %cst_40 = arith.constant 0.176776692 : f32
    %80 = vector.broadcast %cst_40 : f32 to vector<1x8x1xf32>
    %81 = arith.mulf %79, %80 : vector<1x8x1xf32>
    %82 = vector.extract_strided_slice %81 {offsets = [0, 0, 0], sizes = [1, 1, 1], strides = [1, 1, 1]} : vector<1x8x1xf32> to vector<1x1x1xf32>
    %83 = vector.extract_strided_slice %81 {offsets = [0, 1, 0], sizes = [1, 1, 1], strides = [1, 1, 1]} : vector<1x8x1xf32> to vector<1x1x1xf32>
    %84 = arith.maximumf %82, %83 : vector<1x1x1xf32>
    %85 = vector.extract_strided_slice %81 {offsets = [0, 2, 0], sizes = [1, 1, 1], strides = [1, 1, 1]} : vector<1x8x1xf32> to vector<1x1x1xf32>
    %86 = arith.maximumf %84, %85 : vector<1x1x1xf32>
    %87 = vector.extract_strided_slice %81 {offsets = [0, 3, 0], sizes = [1, 1, 1], strides = [1, 1, 1]} : vector<1x8x1xf32> to vector<1x1x1xf32>
    %88 = arith.maximumf %86, %87 : vector<1x1x1xf32>
    %89 = vector.extract_strided_slice %81 {offsets = [0, 4, 0], sizes = [1, 1, 1], strides = [1, 1, 1]} : vector<1x8x1xf32> to vector<1x1x1xf32>
    %90 = arith.maximumf %88, %89 : vector<1x1x1xf32>
    %91 = vector.extract_strided_slice %81 {offsets = [0, 5, 0], sizes = [1, 1, 1], strides = [1, 1, 1]} : vector<1x8x1xf32> to vector<1x1x1xf32>
    %92 = arith.maximumf %90, %91 : vector<1x1x1xf32>
    %93 = vector.extract_strided_slice %81 {offsets = [0, 6, 0], sizes = [1, 1, 1], strides = [1, 1, 1]} : vector<1x8x1xf32> to vector<1x1x1xf32>
    %94 = arith.maximumf %92, %93 : vector<1x1x1xf32>
    %95 = vector.extract_strided_slice %81 {offsets = [0, 7, 0], sizes = [1, 1, 1], strides = [1, 1, 1]} : vector<1x8x1xf32> to vector<1x1x1xf32>
    %96 = arith.maximumf %94, %95 : vector<1x1x1xf32>
    %97 = vector.broadcast %96 : vector<1x1x1xf32> to vector<1x8x1xf32>
    %98 = arith.subf %81, %97 : vector<1x8x1xf32>
    %99 = math.exp %98 : vector<1x8x1xf32>
    %100 = vector.extract_strided_slice %99 {offsets = [0, 0, 0], sizes = [1, 1, 1], strides = [1, 1, 1]} : vector<1x8x1xf32> to vector<1x1x1xf32>
    %101 = vector.extract_strided_slice %99 {offsets = [0, 1, 0], sizes = [1, 1, 1], strides = [1, 1, 1]} : vector<1x8x1xf32> to vector<1x1x1xf32>
    %102 = arith.addf %100, %101 : vector<1x1x1xf32>
    %103 = vector.extract_strided_slice %99 {offsets = [0, 2, 0], sizes = [1, 1, 1], strides = [1, 1, 1]} : vector<1x8x1xf32> to vector<1x1x1xf32>
    %104 = arith.addf %102, %103 : vector<1x1x1xf32>
    %105 = vector.extract_strided_slice %99 {offsets = [0, 3, 0], sizes = [1, 1, 1], strides = [1, 1, 1]} : vector<1x8x1xf32> to vector<1x1x1xf32>
    %106 = arith.addf %104, %105 : vector<1x1x1xf32>
    %107 = vector.extract_strided_slice %99 {offsets = [0, 4, 0], sizes = [1, 1, 1], strides = [1, 1, 1]} : vector<1x8x1xf32> to vector<1x1x1xf32>
    %108 = arith.addf %106, %107 : vector<1x1x1xf32>
    %109 = vector.extract_strided_slice %99 {offsets = [0, 5, 0], sizes = [1, 1, 1], strides = [1, 1, 1]} : vector<1x8x1xf32> to vector<1x1x1xf32>
    %110 = arith.addf %108, %109 : vector<1x1x1xf32>
    %111 = vector.extract_strided_slice %99 {offsets = [0, 6, 0], sizes = [1, 1, 1], strides = [1, 1, 1]} : vector<1x8x1xf32> to vector<1x1x1xf32>
    %112 = arith.addf %110, %111 : vector<1x1x1xf32>
    %113 = vector.extract_strided_slice %99 {offsets = [0, 7, 0], sizes = [1, 1, 1], strides = [1, 1, 1]} : vector<1x8x1xf32> to vector<1x1x1xf32>
    %114 = arith.addf %112, %113 : vector<1x1x1xf32>
    %115 = vector.broadcast %114 : vector<1x1x1xf32> to vector<1x8x1xf32>
    %116 = arith.divf %99, %115 : vector<1x8x1xf32>
    %117 = vector.extract_strided_slice %116 {offsets = [0, 0, 0], sizes = [1, 1, 1], strides = [1, 1, 1]} : vector<1x8x1xf32> to vector<1x1x1xf32>
    %118 = vector.extract_strided_slice %74 {offsets = [0, 0, 0], sizes = [1, 1, 128], strides = [1, 1, 1]} : vector<1x8x128xf32> to vector<1x1x128xf32>
    %119 = vector.broadcast %117 : vector<1x1x1xf32> to vector<1x1x128xf32>
    %120 = arith.mulf %119, %118 : vector<1x1x128xf32>
    %121 = vector.extract_strided_slice %116 {offsets = [0, 1, 0], sizes = [1, 1, 1], strides = [1, 1, 1]} : vector<1x8x1xf32> to vector<1x1x1xf32>
    %122 = vector.extract_strided_slice %74 {offsets = [0, 1, 0], sizes = [1, 1, 128], strides = [1, 1, 1]} : vector<1x8x128xf32> to vector<1x1x128xf32>
    %123 = vector.broadcast %121 : vector<1x1x1xf32> to vector<1x1x128xf32>
    %124 = arith.mulf %123, %122 : vector<1x1x128xf32>
    %125 = arith.addf %120, %124 : vector<1x1x128xf32>
    %126 = vector.extract_strided_slice %116 {offsets = [0, 2, 0], sizes = [1, 1, 1], strides = [1, 1, 1]} : vector<1x8x1xf32> to vector<1x1x1xf32>
    %127 = vector.extract_strided_slice %74 {offsets = [0, 2, 0], sizes = [1, 1, 128], strides = [1, 1, 1]} : vector<1x8x128xf32> to vector<1x1x128xf32>
    %128 = vector.broadcast %126 : vector<1x1x1xf32> to vector<1x1x128xf32>
    %129 = arith.mulf %128, %127 : vector<1x1x128xf32>
    %130 = arith.addf %125, %129 : vector<1x1x128xf32>
    %131 = vector.extract_strided_slice %116 {offsets = [0, 3, 0], sizes = [1, 1, 1], strides = [1, 1, 1]} : vector<1x8x1xf32> to vector<1x1x1xf32>
    %132 = vector.extract_strided_slice %74 {offsets = [0, 3, 0], sizes = [1, 1, 128], strides = [1, 1, 1]} : vector<1x8x128xf32> to vector<1x1x128xf32>
    %133 = vector.broadcast %131 : vector<1x1x1xf32> to vector<1x1x128xf32>
    %134 = arith.mulf %133, %132 : vector<1x1x128xf32>
    %135 = arith.addf %130, %134 : vector<1x1x128xf32>
    %136 = vector.extract_strided_slice %116 {offsets = [0, 4, 0], sizes = [1, 1, 1], strides = [1, 1, 1]} : vector<1x8x1xf32> to vector<1x1x1xf32>
    %137 = vector.extract_strided_slice %74 {offsets = [0, 4, 0], sizes = [1, 1, 128], strides = [1, 1, 1]} : vector<1x8x128xf32> to vector<1x1x128xf32>
    %138 = vector.broadcast %136 : vector<1x1x1xf32> to vector<1x1x128xf32>
    %139 = arith.mulf %138, %137 : vector<1x1x128xf32>
    %140 = arith.addf %135, %139 : vector<1x1x128xf32>
    %141 = vector.extract_strided_slice %116 {offsets = [0, 5, 0], sizes = [1, 1, 1], strides = [1, 1, 1]} : vector<1x8x1xf32> to vector<1x1x1xf32>
    %142 = vector.extract_strided_slice %74 {offsets = [0, 5, 0], sizes = [1, 1, 128], strides = [1, 1, 1]} : vector<1x8x128xf32> to vector<1x1x128xf32>
    %143 = vector.broadcast %141 : vector<1x1x1xf32> to vector<1x1x128xf32>
    %144 = arith.mulf %143, %142 : vector<1x1x128xf32>
    %145 = arith.addf %140, %144 : vector<1x1x128xf32>
    %146 = vector.extract_strided_slice %116 {offsets = [0, 6, 0], sizes = [1, 1, 1], strides = [1, 1, 1]} : vector<1x8x1xf32> to vector<1x1x1xf32>
    %147 = vector.extract_strided_slice %74 {offsets = [0, 6, 0], sizes = [1, 1, 128], strides = [1, 1, 1]} : vector<1x8x128xf32> to vector<1x1x128xf32>
    %148 = vector.broadcast %146 : vector<1x1x1xf32> to vector<1x1x128xf32>
    %149 = arith.mulf %148, %147 : vector<1x1x128xf32>
    %150 = arith.addf %145, %149 : vector<1x1x128xf32>
    %151 = vector.extract_strided_slice %116 {offsets = [0, 7, 0], sizes = [1, 1, 1], strides = [1, 1, 1]} : vector<1x8x1xf32> to vector<1x1x1xf32>
    %152 = vector.extract_strided_slice %74 {offsets = [0, 7, 0], sizes = [1, 1, 128], strides = [1, 1, 1]} : vector<1x8x128xf32> to vector<1x1x128xf32>
    %153 = vector.broadcast %151 : vector<1x1x1xf32> to vector<1x1x128xf32>
    %154 = arith.mulf %153, %152 : vector<1x1x128xf32>
    %155 = arith.addf %150, %154 : vector<1x1x128xf32>
    %156 = vector.shape_cast %155 : vector<1x1x128xf32> to vector<1x128xf32>
    %cst_41 = arith.constant dense<0.000000e+00> : vector<1x128xf32>
    %157 = tpu.matmul %156, %6, %cst_41 {dimension_numbers = #tpu.dot_dimension_numbers<[1], [0], [0], [1], [0, 0, 1, 1], [], []>} : vector<1x128xf32>, vector<128x128xf32>, vector<1x128xf32> -> vector<1x128xf32>
    %158 = arith.addf %157, %16 : vector<1x128xf32>
    %c0_42 = arith.constant 0 : index
    %c0_43 = arith.constant 0 : index
    %159 = vector.load %arg3[%c0_42, %c0_43] : memref<8x128xf32, #tpu.memory_space<vmem>>, vector<8x128xf32>
    %cst_44 = arith.constant dense<0.000000e+00> : vector<8x128xf32>
    %160 = tpu.matmul %159, %7, %cst_44 {dimension_numbers = #tpu.dot_dimension_numbers<[1], [0], [0], [1], [0, 0, 1, 1], [], []>} : vector<8x128xf32>, vector<128x128xf32>, vector<8x128xf32> -> vector<8x128xf32>
    %cst_45 = arith.constant dense<0.000000e+00> : vector<8x128xf32>
    %161 = tpu.matmul %65, %8, %cst_45 {dimension_numbers = #tpu.dot_dimension_numbers<[1], [0], [0], [1], [0, 0, 1, 1], [], []>} : vector<8x128xf32>, vector<128x128xf32>, vector<8x128xf32> -> vector<8x128xf32>
    %162 = arith.addf %160, %161 : vector<8x128xf32>
    %163 = vector.broadcast %17 : vector<1x128xf32> to vector<8x128xf32>
    %164 = arith.addf %162, %163 : vector<8x128xf32>
    %165 = arith.negf %164 : vector<8x128xf32>
    %166 = math.exp %165 : vector<8x128xf32>
    %cst_46 = arith.constant 1.000000e+00 : f32
    %167 = vector.broadcast %cst_46 : f32 to vector<8x128xf32>
    %168 = arith.addf %167, %166 : vector<8x128xf32>
    %169 = arith.divf %167, %168 : vector<8x128xf32>
    %170 = arith.subf %159, %65 : vector<8x128xf32>
    %171 = arith.mulf %169, %170 : vector<8x128xf32>
    %172 = arith.addf %65, %171 : vector<8x128xf32>
    %c0_47 = arith.constant 0 : index
    %c0_48 = arith.constant 0 : index
    %173 = vector.load %arg7[%c0_47, %c0_48] : memref<8x128xf32, #tpu.memory_space<vmem>>, vector<8x128xf32>
    tpu.vector_store %arg7[%c0_47, %c0_48], %172 {strides = array<i32>} : memref<8x128xf32, #tpu.memory_space<vmem>>, vector<8x128xf32>,
    %174 = vector.shape_cast %158 : vector<1x128xf32> to vector<1x1x128xf32>
    %c0_49 = arith.constant 0 : index
    %c0_50 = arith.constant 0 : index
    %c0_51 = arith.constant 0 : index
    %175 = vector.load %arg8[%c0_49, %c0_50, %c0_51] : memref<1x1x128xf32, #tpu.memory_space<vmem>>, vector<1x1x128xf32>
    tpu.vector_store %arg8[%c0_49, %c0_50, %c0_51], %174 {strides = array<i32>} : memref<1x1x128xf32, #tpu.memory_space<vmem>>, vector<1x1x128xf32>,
    return
  }
  func.func @transform_0(%arg0: i32) -> (i32, i32) {
    %c0_i32 = arith.constant 0 : i32
    %c0_i32_0 = arith.constant 0 : i32
    return %arg0, %c0_i32 : i32, i32
  }
  func.func @transform_1(%arg0: i32) -> (i32, i32) {
    %c0_i32 = arith.constant 0 : i32
    %c0_i32_0 = arith.constant 0 : i32
    return %arg0, %c0_i32 : i32, i32
  }
  func.func @transform_2(%arg0: i32) -> (i32, i32) {
    %c0_i32 = arith.constant 0 : i32
    %c0_i32_0 = arith.constant 0 : i32
    return %arg0, %c0_i32 : i32, i32
  }
  func.func @transform_3(%arg0: i32) -> (i32, i32, i32) {
    %c0_i32 = arith.constant 0 : i32
    %c0_i32_0 = arith.constant 0 : i32
    %c0_i32_1 = arith.constant 0 : i32
    return %arg0, %c0_i32, %c0_i32_0 : i32, i32, i32
  }
  func.func @transform_4(%arg0: i32) -> (i32, i32) {
    %c0_i32 = arith.constant 0 : i32
    %c0_i32_0 = arith.constant 0 : i32
    %c0_i32_1 = arith.constant 0 : i32
    return %c0_i32, %c0_i32_0 : i32, i32
  }
  func.func @transform_5(%arg0: i32) -> (i32, i32) {
    %c0_i32 = arith.constant 0 : i32
    %c0_i32_0 = arith.constant 0 : i32
    %c0_i32_1 = arith.constant 0 : i32
    return %c0_i32, %c0_i32_0 : i32, i32
  }
  func.func @transform_6(%arg0: i32) -> (i32, i32) {
    %c0_i32 = arith.constant 0 : i32
    %c0_i32_0 = arith.constant 0 : i32
    return %arg0, %c0_i32 : i32, i32
  }
  func.func @transform_7(%arg0: i32) -> (i32, i32, i32) {
    %c0_i32 = arith.constant 0 : i32
    %c0_i32_0 = arith.constant 0 : i32
    %c0_i32_1 = arith.constant 0 : i32
    return %arg0, %c0_i32, %c0_i32_0 : i32, i32, i32
  }
}

</mosaic_0001>

<llo_original>
// kernel: tpu_custom_call.1
$region0: #{tpu_custom_call.1}
  #allocation0 [shape = 'u32[]', space=smem, size = 0x4, offset = 0x4, fixed_abs, tag = 'smem constant byte address 0x4 - core index']
  #allocation1 [shape = 'u32[144,128]{1,0:T(1,128)}', space=vmem, size = 0x12000, scoped, tag = 'internal scratch']
  %s0 = inlined_call_operand.vmem [shape: f32[16,8], index: 0, kind: input, shape index: {}]
  %s1 = inlined_call_operand.vmem [shape: f32[16,8], index: 1, kind: input, shape index: {}]
  %s2 = inlined_call_operand.hbm [shape: f32[16,128], index: 2, kind: input, shape index: {}]
  %s3 = inlined_call_operand.hbm [shape: f32[2,1,128], index: 3, kind: input, shape index: {}]
  %s4 = inlined_call_operand.hbm [shape: f32[128,2176], index: 4, kind: input, shape index: {}]
  %s5 = inlined_call_operand.hbm [shape: f32[1,1920], index: 5, kind: input, shape index: {}]
  %s6 = inlined_call_operand.hbm [shape: f32[16,128], index: 6, kind: output, shape index: {0}]
  %s7 = inlined_call_operand.hbm [shape: f32[2,1,128], index: 7, kind: output, shape index: {1}]
  %8 = xla_tuple %s6, %s7
  %s9 = sld [smem:[#allocation0]]
  $region81: #{tpu_custom_call.1} parent=0
    _
  %s11 = ssub.s32 1, %s9
  %s12 = scalar_select 0, %s11, %s9
  $region1: #{tpu_custom_call.1} parent=0
    #allocation2 [shape = 'u8[8192]{0}', space=vmem, size = 0x2000, scoped, tag = 'input window, operand 2']
    #allocation3 [shape = 's32[2]{0}', space=sflag, size = 0x8, scoped, tag = 'scoped memory for tpu_custom_call.1']
    #allocation4 [shape = 's32[2]{0}', space=sflag, size = 0x8, scoped, tag = 'scoped memory for tpu_custom_call.1']
    #allocation5 [shape = 'u8[1024]{0}', space=vmem, size = 0x400, scoped, tag = 'input window, operand 3']
    #allocation6 [shape = 's32[2]{0}', space=sflag, size = 0x8, scoped, tag = 'scoped memory for tpu_custom_call.1']
    #allocation7 [shape = 'u8[1114112]{0}', space=vmem, size = 0x110000, scoped, tag = 'input window, operand 4, single buffered']
    #allocation8 [shape = 'u8[7680]{0}', space=vmem, size = 0x2000, scoped, tag = 'input window, operand 5, single buffered']
    #allocation9 [shape = 's32[1]{0}', space=sflag, size = 0x4, scoped, tag = 'scoped memory for tpu_custom_call.1']
    #allocation10 [shape = 'u8[8192]{0}', space=vmem, size = 0x2000, scoped, tag = 'output window, operand 0']
    #allocation11 [shape = 'u8[1024]{0}', space=vmem, size = 0x400, scoped, tag = 'output window, operand 1']
    #allocation12 [shape = 's32[2]{0}', space=sflag, size = 0x8, scoped, tag = 'scoped memory for tpu_custom_call.1']
    %13 = vsyncpa [#allocation3], 0
    %s14 = scalar_lea.sflag [#allocation3], 1
    %15 = vsyncpa %s14, 0
    %16 = vsyncpa [#allocation6], 0
    %s17 = scalar_lea.sflag [#allocation6], 1
    %18 = vsyncpa %s17, 0
    %19 = vsyncpa [#allocation9], 0
    %20 = vsyncpa [#allocation4], 0
    %s21 = scalar_lea.sflag [#allocation4], 1
    %22 = vsyncpa %s21, 0
    %23 = vsyncpa [#allocation12], 0
    %s24 = scalar_lea.sflag [#allocation12], 1
    %25 = vsyncpa %s24, 0
    loop: start=0, step=1, limit=4
    $region2: #{tpu_custom_call.1} parent=1 // loop_pre_header
      _
    $region3: #{tpu_custom_call.1} parent=1 // loop_header
      %s27 = sphi 0, %s31
      %p28 = scmp.ge.s32.totalorder %s27, 4
      %s37 = sphi 0, %s39
      %s40 = sphi 0, %s37
      %s41 = sphi 0, %s40
      %s57 = sphi 0, %s41
      %s63 = sphi 0, %s65
      %s66 = sphi 0, %s63
      %s67 = sphi 0, %s66
      %s83 = sphi 0, %s67
      %s89 = sphi 0, %s91
      %s92 = sphi 0, %s89
      %s93 = sphi 0, %s92
      %s109 = sphi 0, %s93
      %s115 = sphi 0, %s117
      %s118 = sphi 0, %s115
      %s119 = sphi 0, %s118
      %s135 = sphi 0, %s119
      %s139 = sphi 0, %s139
      %s141 = sphi 0, %s139
      %s142 = sphi 0, %s141
      %s156 = sphi 0, %s142
      %s160 = sphi 0, %s160
      %s162 = sphi 0, %s160
      %s163 = sphi 0, %s162
      %s177 = sphi 0, %s163
      %s183 = sphi 0, %s185
      %s186 = sphi 0, %s183
      %s187 = sphi 0, %s186
      %s203 = sphi 0, %s187
      %s209 = sphi 0, %s211
      %s212 = sphi 0, %s209
      %s213 = sphi 0, %s212
      %s229 = sphi 0, %s213
    $region4: #{tpu_custom_call.1} parent=1 // loop_header_branch
      %30 = sbr.rel (%p28) target = $region8
    $region5: #{tpu_custom_call.1} parent=1 // loop_body
      %s32 = ssub.s32 %s27, 1
      %s33 = ssub.s32 %s27, 2
      %s34 = sadd.s32 %s27, 1
      %s35 = ssub.s32 %s27, %s34
      %p36 = scmp.eq.s32.totalorder %s35, 0
      %s38 = sadd.s32 %s37, 1
      %s39 = scalar_select %p36, %s37, %s38
      %p42 = pneg %p36
      %p43 = scmp.eq.s32.totalorder %s27, 1
      %p44 = por %p42, %p43
      %p45 = scmp.ne.s32.totalorder %s37, %s40
      %p46 = scmp.eq.s32.totalorder %s27, 0
      %p47 = por %p45, %p46
      %p48 = scmp.ne.s32.totalorder %s37, %s40
      %p49 = scmp.eq.s32.totalorder %s32, 1
      %p50 = por %p48, %p49
      %p51 = scmp.ne.s32.totalorder %s40, %s41
      %p52 = scmp.eq.s32.totalorder %s32, 0
      %p53 = por %p51, %p52
      %p54 = scmp.ne.s32.totalorder %s40, %s41
      %p55 = scmp.eq.s32.totalorder %s33, 1
      %p56 = por %p54, %p55
      %p58 = scmp.ne.s32.totalorder %s41, %s57
      %p59 = scmp.eq.s32.totalorder %s33, 0
      %p60 = por %p58, %p59
      %s61 = ssub.s32 %s27, %s34
      %p62 = scmp.eq.s32.totalorder %s61, 0
      %s64 = sadd.s32 %s63, 1
      %s65 = scalar_select %p62, %s63, %s64
      %p68 = pneg %p62
      %p69 = scmp.eq.s32.totalorder %s27, 1
      %p70 = por %p68, %p69
      %p71 = scmp.ne.s32.totalorder %s63, %s66
      %p72 = scmp.eq.s32.totalorder %s27, 0
      %p73 = por %p71, %p72
      %p74 = scmp.ne.s32.totalorder %s63, %s66
      %p75 = scmp.eq.s32.totalorder %s32, 1
      %p76 = por %p74, %p75
      %p77 = scmp.ne.s32.totalorder %s66, %s67
      %p78 = scmp.eq.s32.totalorder %s32, 0
      %p79 = por %p77, %p78
      %p80 = scmp.ne.s32.totalorder %s66, %s67
      %p81 = scmp.eq.s32.totalorder %s33, 1
      %p82 = por %p80, %p81
      %p84 = scmp.ne.s32.totalorder %s67, %s83
      %p85 = scmp.eq.s32.totalorder %s33, 0
      %p86 = por %p84, %p85
      %s87 = ssub.s32 %s27, %s34
      %p88 = scmp.eq.s32.totalorder %s87, 0
      %s90 = sadd.s32 %s89, 1
      %s91 = scalar_select %p88, %s89, %s90
      %p94 = pneg %p88
      %p95 = scmp.eq.s32.totalorder %s27, 1
      %p96 = por %p94, %p95
      %p97 = scmp.ne.s32.totalorder %s89, %s92
      %p98 = scmp.eq.s32.totalorder %s27, 0
      %p99 = por %p97, %p98
      %p100 = scmp.ne.s32.totalorder %s89, %s92
      %p101 = scmp.eq.s32.totalorder %s32, 1
      %p102 = por %p100, %p101
      %p103 = scmp.ne.s32.totalorder %s92, %s93
      %p104 = scmp.eq.s32.totalorder %s32, 0
      %p105 = por %p103, %p104
      %p106 = scmp.ne.s32.totalorder %s92, %s93
      %p107 = scmp.eq.s32.totalorder %s33, 1
      %p108 = por %p106, %p107
      %p110 = scmp.ne.s32.totalorder %s93, %s109
      %p111 = scmp.eq.s32.totalorder %s33, 0
      %p112 = por %p110, %p111
      %s113 = ssub.s32 %s27, %s34
      %p114 = scmp.eq.s32.totalorder %s113, 0
      %s116 = sadd.s32 %s115, 1
      %s117 = scalar_select %p114, %s115, %s116
      %p120 = pneg %p114
      %p121 = scmp.eq.s32.totalorder %s27, 1
      %p122 = por %p120, %p121
      %p123 = scmp.ne.s32.totalorder %s115, %s118
      %p124 = scmp.eq.s32.totalorder %s27, 0
      %p125 = por %p123, %p124
      %p126 = scmp.ne.s32.totalorder %s115, %s118
      %p127 = scmp.eq.s32.totalorder %s32, 1
      %p128 = por %p126, %p127
      %p129 = scmp.ne.s32.totalorder %s118, %s119
      %p130 = scmp.eq.s32.totalorder %s32, 0
      %p131 = por %p129, %p130
      %p132 = scmp.ne.s32.totalorder %s118, %s119
      %p133 = scmp.eq.s32.totalorder %s33, 1
      %p134 = por %p132, %p133
      %p136 = scmp.ne.s32.totalorder %s119, %s135
      %p137 = scmp.eq.s32.totalorder %s33, 0
      %p138 = por %p136, %p137
      %s140 = sadd.s32 %s139, 1
      %p143 = scmp.eq.s32.totalorder %s27, 1
      %p144 = scmp.ne.s32.totalorder %s139, %s141
      %p145 = scmp.eq.s32.totalorder %s27, 0
      %p146 = por %p144, %p145
      %p147 = scmp.ne.s32.totalorder %s139, %s141
      %p148 = scmp.eq.s32.totalorder %s32, 1
      %p149 = por %p147, %p148
      %p150 = scmp.ne.s32.totalorder %s141, %s142
      %p151 = scmp.eq.s32.totalorder %s32, 0
      %p152 = por %p150, %p151
      %p153 = scmp.ne.s32.totalorder %s141, %s142
      %p154 = scmp.eq.s32.totalorder %s33, 1
      %p155 = por %p153, %p154
      %p157 = scmp.ne.s32.totalorder %s142, %s156
      %p158 = scmp.eq.s32.totalorder %s33, 0
      %p159 = por %p157, %p158
      %s161 = sadd.s32 %s160, 1
      %p164 = scmp.eq.s32.totalorder %s27, 1
      %p165 = scmp.ne.s32.totalorder %s160, %s162
      %p166 = scmp.eq.s32.totalorder %s27, 0
      %p167 = por %p165, %p166
      %p168 = scmp.ne.s32.totalorder %s160, %s162
      %p169 = scmp.eq.s32.totalorder %s32, 1
      %p170 = por %p168, %p169
      %p171 = scmp.ne.s32.totalorder %s162, %s163
      %p172 = scmp.eq.s32.totalorder %s32, 0
      %p173 = por %p171, %p172
      %p174 = scmp.ne.s32.totalorder %s162, %s163
      %p175 = scmp.eq.s32.totalorder %s33, 1
      %p176 = por %p174, %p175
      %p178 = scmp.ne.s32.totalorder %s163, %s177
      %p179 = scmp.eq.s32.totalorder %s33, 0
      %p180 = por %p178, %p179
      %s181 = ssub.s32 %s27, %s34
      %p182 = scmp.eq.s32.totalorder %s181, 0
      %s184 = sadd.s32 %s183, 1
      %s185 = scalar_select %p182, %s183, %s184
      %p188 = pneg %p182
      %p189 = scmp.eq.s32.totalorder %s27, 1
      %p190 = por %p188, %p189
      %p191 = scmp.ne.s32.totalorder %s183, %s186
      %p192 = scmp.eq.s32.totalorder %s27, 0
      %p193 = por %p191, %p192
      %p194 = scmp.ne.s32.totalorder %s183, %s186
      %p195 = scmp.eq.s32.totalorder %s32, 1
      %p196 = por %p194, %p195
      %p197 = scmp.ne.s32.totalorder %s186, %s187
      %p198 = scmp.eq.s32.totalorder %s32, 0
      %p199 = por %p197, %p198
      %p200 = scmp.ne.s32.totalorder %s186, %s187
      %p201 = scmp.eq.s32.totalorder %s33, 1
      %p202 = por %p200, %p201
      %p204 = scmp.ne.s32.totalorder %s187, %s203
      %p205 = scmp.eq.s32.totalorder %s33, 0
      %p206 = por %p204, %p205
      %s207 = ssub.s32 %s27, %s34
      %p208 = scmp.eq.s32.totalorder %s207, 0
      %s210 = sadd.s32 %s209, 1
      %s211 = scalar_select %p208, %s209, %s210
      %p214 = pneg %p208
      %p215 = scmp.eq.s32.totalorder %s27, 1
      %p216 = por %p214, %p215
      %p217 = scmp.ne.s32.totalorder %s209, %s212
      %p218 = scmp.eq.s32.totalorder %s27, 0
      %p219 = por %p217, %p218
      %p220 = scmp.ne.s32.totalorder %s209, %s212
      %p221 = scmp.eq.s32.totalorder %s32, 1
      %p222 = por %p220, %p221
      %p223 = scmp.ne.s32.totalorder %s212, %s213
      %p224 = scmp.eq.s32.totalorder %s32, 0
      %p225 = por %p223, %p224
      %p226 = scmp.ne.s32.totalorder %s212, %s213
      %p227 = scmp.eq.s32.totalorder %s33, 1
      %p228 = por %p226, %p227
      %p230 = scmp.ne.s32.totalorder %s213, %s229
      %p231 = scmp.eq.s32.totalorder %s33, 0
      %p232 = por %p230, %p231
      %p233 = scmp.le.s32.totalorder 1, %s27
      %p234 = scmp.lt.s32.totalorder %s27, 3
      %p235 = pnand %p233, %p234
      %p236 = pneg %p235
      // Predicated region
      $region9: #{tpu_custom_call.1} parent=5 // pred_check
        _
      $region10: #{tpu_custom_call.1} parent=5 // pred_check_branch
        %238 = sbr.rel (%p235) target = $region12
      $region11: #{tpu_custom_call.1} parent=5 // pred_region
        %s239 = ssub.s32 %s27, 1
        // Predicated region
        $region13: #{tpu_custom_call.1} parent=11 // pred_check
          %p240 = pneg %p152
        $region14: #{tpu_custom_call.1} parent=11 // pred_check_branch
          %242 = sbr.rel (%p240) target = $region16
        $region15: #{tpu_custom_call.1} parent=11 // pred_region
          %s244 = ssub.s32 34816, 34816
          %245 = vsyncadd [#allocation6], %s244
          %s246 = sshll.u32 [#allocation7], 4
          %s247 = int_to_ptr.vmem [resolvable:$true] %s246
          %252 = dma.hbm_to_vmem [thread:$0]  %s4, 34816, %s247, [#allocation6], 2176, 2176, 136
        $region16: #{tpu_custom_call.1} parent=11 // pred_fallthru
          _
        // Predicated region
        $region17: #{tpu_custom_call.1} parent=11 // pred_check
          %p253 = pneg %p173
        $region18: #{tpu_custom_call.1} parent=11 // pred_check_branch
          %255 = sbr.rel (%p253) target = $region20
        $region19: #{tpu_custom_call.1} parent=11 // pred_region
          %s257 = ssub.s32 240, 240
          %258 = vsyncadd [#allocation9], %s257
          %s260 = sshll.u32 [#allocation8], 4
          %s261 = int_to_ptr.vmem [resolvable:$true] %s260
          %263 = dma.hbm_to_vmem [thread:$0]  %s5, 240, %s261, [#allocation9]
        $region20: #{tpu_custom_call.1} parent=11 // pred_fallthru
          _
      $region12: #{tpu_custom_call.1} parent=5 // pred_fallthru
        _
      %p264 = scmp.lt.s32.totalorder %s27, 2
      // Predicated region
      $region21: #{tpu_custom_call.1} parent=5 // pred_check
        %p265 = pneg %p264
      $region22: #{tpu_custom_call.1} parent=5 // pred_check_branch
        %267 = sbr.rel (%p265) target = $region24
      $region23: #{tpu_custom_call.1} parent=5 // pred_region
        // Predicated region
        $region25: #{tpu_custom_call.1} parent=23 // pred_check
          %p268 = pneg %p47
        $region26: #{tpu_custom_call.1} parent=23 // pred_check_branch
          %270 = sbr.rel (%p268) target = $region28
        $region27: #{tpu_custom_call.1} parent=23 // pred_region
          %p271 = scmp.lt.s32.totalorder %s27, 1
          %s272 = scalar_select %p271, %s27, 1
          %s273 = smul.addr %s272, 8
          %s274 = scalar_lea.vmem %s0, %s273
        $region28: #{tpu_custom_call.1} parent=23 // pred_fallthru
          _
        // Predicated region
        $region29: #{tpu_custom_call.1} parent=23 // pred_check
          %p275 = pneg %p73
        $region30: #{tpu_custom_call.1} parent=23 // pred_check_branch
          %277 = sbr.rel (%p275) target = $region32
        $region31: #{tpu_custom_call.1} parent=23 // pred_region
          %p278 = scmp.lt.s32.totalorder %s27, 1
          %s279 = scalar_select %p278, %s27, 1
          %s280 = smul.addr %s279, 8
          %s281 = scalar_lea.vmem %s1, %s280
        $region32: #{tpu_custom_call.1} parent=23 // pred_fallthru
          _
        // Predicated region
        $region33: #{tpu_custom_call.1} parent=23 // pred_check
          %p282 = pneg %p99
        $region34: #{tpu_custom_call.1} parent=23 // pred_check_branch
          %284 = sbr.rel (%p282) target = $region36
        $region35: #{tpu_custom_call.1} parent=23 // pred_region
          %s285 = sand.u32 %s89, 1
          %s286 = scalar_lea.sflag [#allocation3], %s285
          %s287 = sand.u32 %s89, 1
          %s288 = smul.addr %s287, 8
          %s289 = scalar_lea.vmem [#allocation2], %s288
          %s291 = ssub.s32 128, 128
          %292 = vsyncadd %s286, %s291
          %s293 = smul.addr %s27, 128
          %s294 = scalar_lea.hbm %s2, %s293
          %s296 = sshll.u32 %s289, 4
          %s297 = int_to_ptr.vmem [resolvable:$true] %s296
          %299 = dma.hbm_to_vmem [thread:$0]  %s294, 128, %s297, %s286
        $region36: #{tpu_custom_call.1} parent=23 // pred_fallthru
          _
        // Predicated region
        $region37: #{tpu_custom_call.1} parent=23 // pred_check
          %p300 = pneg %p125
        $region38: #{tpu_custom_call.1} parent=23 // pred_check_branch
          %302 = sbr.rel (%p300) target = $region40
        $region39: #{tpu_custom_call.1} parent=23 // pred_region
          %s303 = sand.u32 %s27, 1
          %s304 = scalar_lea.sflag [#allocation6], %s303
          %s305 = sand.u32 %s115, 1
          %s306 = scalar_lea.vmem [#allocation5], %s305
          %s308 = ssub.s32 16, 16
          %309 = vsyncadd %s304, %s308
          %s310 = smul.addr %s27, 16
          %s311 = scalar_lea.hbm %s3, %s310
          %s313 = sshll.u32 %s306, 4
          %s314 = int_to_ptr.vmem [resolvable:$true] %s313
          %316 = dma.hbm_to_vmem [thread:$0]  %s311, 16, %s314, %s304
        $region40: #{tpu_custom_call.1} parent=23 // pred_fallthru
          _
      $region24: #{tpu_custom_call.1} parent=5 // pred_fallthru
        _
      %p317 = scmp.le.s32.totalorder 1, %s27
      %p318 = scmp.lt.s32.totalorder %s27, 3
      %p319 = pnand %p317, %p318
      %p320 = pneg %p319
      // Predicated region
      $region41: #{tpu_custom_call.1} parent=5 // pred_check
        _
      $region42: #{tpu_custom_call.1} parent=5 // pred_check_branch
        %322 = sbr.rel (%p319) target = $region44
      $region43: #{tpu_custom_call.1} parent=5 // pred_region
        %s323 = ssub.s32 %s27, 1
        %s324 = sand.u32 %s92, 1
        %s325 = scalar_lea.sflag [#allocation3], %s324
        %s326 = sand.u32 %s92, 1
        %s327 = smul.addr %s326, 8
        %s328 = scalar_lea.vmem [#allocation2], %s327
        // Predicated region
        $region45: #{tpu_custom_call.1} parent=43 // pred_check
          %p329 = pneg %p105
        $region46: #{tpu_custom_call.1} parent=43 // pred_check_branch
          %331 = sbr.rel (%p329) target = $region48
        $region47: #{tpu_custom_call.1} parent=43 // pred_region
          %332 = dma.done %s325, 128
        $region48: #{tpu_custom_call.1} parent=43 // pred_fallthru
          _
        %s333 = sand.u32 %s32, 1
        %s334 = scalar_lea.sflag [#allocation6], %s333
        %s335 = sand.u32 %s118, 1
        %s336 = scalar_lea.vmem [#allocation5], %s335
        // Predicated region
        $region49: #{tpu_custom_call.1} parent=43 // pred_check
          %p337 = pneg %p131
        $region50: #{tpu_custom_call.1} parent=43 // pred_check_branch
          %339 = sbr.rel (%p337) target = $region52
        $region51: #{tpu_custom_call.1} parent=43 // pred_region
          %340 = dma.done %s334, 16
        $region52: #{tpu_custom_call.1} parent=43 // pred_fallthru
          _
        // Predicated region
        $region53: #{tpu_custom_call.1} parent=43 // pred_check
          %p341 = pneg %p152
        $region54: #{tpu_custom_call.1} parent=43 // pred_check_branch
          %343 = sbr.rel (%p341) target = $region56
        $region55: #{tpu_custom_call.1} parent=43 // pred_region
          %344 = dma.done [#allocation6], 34816
        $region56: #{tpu_custom_call.1} parent=43 // pred_fallthru
          _
        // Predicated region
        $region57: #{tpu_custom_call.1} parent=43 // pred_check
          %p345 = pneg %p173
        $region58: #{tpu_custom_call.1} parent=43 // pred_check_branch
          %347 = sbr.rel (%p345) target = $region60
        $region59: #{tpu_custom_call.1} parent=43 // pred_region
          %348 = dma.done [#allocation9], 240
        $region60: #{tpu_custom_call.1} parent=43 // pred_fallthru
          _
        %p349 = scmp.lt.s32.totalorder %s32, 1
        %s350 = scalar_select %p349, %s32, 1
        %s351 = smul.addr %s350, 8
        %s352 = scalar_lea.vmem %s0, %s351
        %p353 = pneg %p53
        %p354 = pneg %p50
        %p355 = scmp.lt.s32.totalorder %s32, 1
        %s356 = scalar_select %p355, %s32, 1
        %s357 = smul.addr %s356, 8
        %s358 = scalar_lea.vmem %s1, %s357
        %p359 = pneg %p79
        %p360 = pneg %p76
        %s361 = sand.u32 %s92, 1
        %s362 = scalar_lea.sflag [#allocation3], %s361
        %s363 = sand.u32 %s92, 1
        %s364 = smul.addr %s363, 8
        %s365 = scalar_lea.vmem [#allocation2], %s364
        %p366 = pneg %p105
        %p367 = pneg %p102
        %s368 = sand.u32 %s32, 1
        %s369 = scalar_lea.sflag [#allocation6], %s368
        %s370 = sand.u32 %s118, 1
        %s371 = scalar_lea.vmem [#allocation5], %s370
        %p372 = pneg %p131
        %p373 = pneg %p128
        %p374 = pneg %p152
        %p375 = pneg %p149
        %p376 = pneg %p173
        %p377 = pneg %p170
        %p378 = pneg %p199
        %p379 = pneg %p196
        %s380 = sand.u32 %s186, 1
        %s381 = scalar_lea.sflag [#allocation4], %s380
        %s382 = sand.u32 %s186, 1
        %s383 = smul.addr %s382, 8
        %s384 = scalar_lea.vmem [#allocation10], %s383
        %p385 = pneg %p225
        %p386 = pneg %p222
        %s387 = sand.u32 %s212, 1
        %s388 = scalar_lea.sflag [#allocation12], %s387
        %s389 = sand.u32 %s212, 1
        %s390 = scalar_lea.vmem [#allocation11], %s389
        %p391 = scmp.lt.s32.totalorder %s32, 1
        %s392 = scalar_select %p391, %s32, 1
        %s393 = smul.addr %s392, 8
        %s394 = scalar_lea.vmem %s0, %s393
        %p395 = scmp.lt.s32.totalorder %s32, 1
        %s396 = scalar_select %p395, %s32, 1
        %s397 = smul.addr %s396, 8
        %s398 = scalar_lea.vmem %s1, %s397
        %v399 = vld [vmem:[#allocation7] sm:$0xff]
        %v400 = vld [vmem:[#allocation7 + $0x8] sm:$0xff]
        %v401 = vld [vmem:[#allocation7 + $0x88] sm:$0xff]
        %v402 = vld [vmem:[#allocation7 + $0x90] sm:$0xff]
        %v403 = vld [vmem:[#allocation7 + $0x110] sm:$0xff]
        %v404 = vld [vmem:[#allocation7 + $0x118] sm:$0xff]
        %v405 = vld [vmem:[#allocation7 + $0x198] sm:$0xff]
        %v406 = vld [vmem:[#allocation7 + $0x1a0] sm:$0xff]
        %v407 = vld [vmem:[#allocation7 + $0x220] sm:$0xff]
        %v408 = vld [vmem:[#allocation7 + $0x228] sm:$0xff]
        %v409 = vld [vmem:[#allocation7 + $0x2a8] sm:$0xff]
        %v410 = vld [vmem:[#allocation7 + $0x2b0] sm:$0xff]
        %v411 = vld [vmem:[#allocation7 + $0x330] sm:$0xff]
        %v412 = vld [vmem:[#allocation7 + $0x338] sm:$0xff]
        %v413 = vld [vmem:[#allocation7 + $0x3b8] sm:$0xff]
        %v414 = vld [vmem:[#allocation7 + $0x3c0] sm:$0xff]
        %v415 = vld [vmem:[#allocation7 + $0x440] sm:$0xff]
        %v416 = vld [vmem:[#allocation7 + $0x448] sm:$0xff]
        %v417 = vld [vmem:[#allocation7 + $0x4c8] sm:$0xff]
        %v418 = vld [vmem:[#allocation7 + $0x4d0] sm:$0xff]
        %v419 = vld [vmem:[#allocation7 + $0x550] sm:$0xff]
        %v420 = vld [vmem:[#allocation7 + $0x558] sm:$0xff]
        %v421 = vld [vmem:[#allocation7 + $0x5d8] sm:$0xff]
        %v422 = vld [vmem:[#allocation7 + $0x5e0] sm:$0xff]
        %v423 = vld [vmem:[#allocation7 + $0x660] sm:$0xff]
        %v424 = vld [vmem:[#allocation7 + $0x668] sm:$0xff]
        %v425 = vld [vmem:[#allocation7 + $0x6e8] sm:$0xff]
        %v426 = vld [vmem:[#allocation7 + $0x6f0] sm:$0xff]
        %v427 = vld [vmem:[#allocation7 + $0x770] sm:$0xff]
        %v428 = vld [vmem:[#allocation7 + $0x778] sm:$0xff]
        %v429 = vld [vmem:[#allocation7 + $0x7f8] sm:$0xff]
        %v430 = vld [vmem:[#allocation7 + $0x800] sm:$0xff]
        %v431 = vld [vmem:[#allocation7 + $0x10] sm:$0xff]
        %v432 = vld [vmem:[#allocation7 + $0x18] sm:$0xff]
        %v433 = vld [vmem:[#allocation7 + $0x20] sm:$0xff]
        %v434 = vld [vmem:[#allocation7 + $0x98] sm:$0xff]
        %v435 = vld [vmem:[#allocation7 + $0xa0] sm:$0xff]
        %v436 = vld [vmem:[#allocation7 + $0xa8] sm:$0xff]
        %v437 = vld [vmem:[#allocation7 + $0x120] sm:$0xff]
        %v438 = vld [vmem:[#allocation7 + $0x128] sm:$0xff]
        %v439 = vld [vmem:[#allocation7 + $0x130] sm:$0xff]
        %v440 = vld [vmem:[#allocation7 + $0x1a8] sm:$0xff]
        %v441 = vld [vmem:[#allocation7 + $0x1b0] sm:$0xff]
        %v442 = vld [vmem:[#allocation7 + $0x1b8] sm:$0xff]
        %v443 = vld [vmem:[#allocation7 + $0x230] sm:$0xff]
        %v444 = vld [vmem:[#allocation7 + $0x238] sm:$0xff]
        %v445 = vld [vmem:[#allocation7 + $0x240] sm:$0xff]
        %v446 = vld [vmem:[#allocation7 + $0x2b8] sm:$0xff]
        %v447 = vld [vmem:[#allocation7 + $0x2c0] sm:$0xff]
        %v448 = vld [vmem:[#allocation7 + $0x2c8] sm:$0xff]
        %v449 = vld [vmem:[#allocation7 + $0x340] sm:$0xff]
        %v450 = vld [vmem:[#allocation7 + $0x348] sm:$0xff]
        %v451 = vld [vmem:[#allocation7 + $0x350] sm:$0xff]
        %v452 = vld [vmem:[#allocation7 + $0x3c8] sm:$0xff]
        %v453 = vld [vmem:[#allocation7 + $0x3d0] sm:$0xff]
        %v454 = vld [vmem:[#allocation7 + $0x3d8] sm:$0xff]
        %v455 = vld [vmem:[#allocation7 + $0x450] sm:$0xff]
        %v456 = vld [vmem:[#allocation7 + $0x458] sm:$0xff]
        %v457 = vld [vmem:[#allocation7 + $0x460] sm:$0xff]
        %v458 = vld [vmem:[#allocation7 + $0x4d8] sm:$0xff]
        %v459 = vld [vmem:[#allocation7 + $0x4e0] sm:$0xff]
        %v460 = vld [vmem:[#allocation7 + $0x4e8] sm:$0xff]
        %v461 = vld [vmem:[#allocation7 + $0x560] sm:$0xff]
        %v462 = vld [vmem:[#allocation7 + $0x568] sm:$0xff]
        %v463 = vld [vmem:[#allocation7 + $0x570] sm:$0xff]
        %v464 = vld [vmem:[#allocation7 + $0x5e8] sm:$0xff]
        %v465 = vld [vmem:[#allocation7 + $0x5f0] sm:$0xff]
        %v466 = vld [vmem:[#allocation7 + $0x5f8] sm:$0xff]
        %v467 = vld [vmem:[#allocation7 + $0x670] sm:$0xff]
        %v468 = vld [vmem:[#allocation7 + $0x678] sm:$0xff]
        %v469 = vld [vmem:[#allocation7 + $0x680] sm:$0xff]
        %v470 = vld [vmem:[#allocation7 + $0x6f8] sm:$0xff]
        %v471 = vld [vmem:[#allocation7 + $0x700] sm:$0xff]
        %v472 = vld [vmem:[#allocation7 + $0x708] sm:$0xff]
        %v473 = vld [vmem:[#allocation7 + $0x780] sm:$0xff]
        %v474 = vld [vmem:[#allocation7 + $0x788] sm:$0xff]
        %v475 = vld [vmem:[#allocation7 + $0x790] sm:$0xff]
        %v476 = vld [vmem:[#allocation7 + $0x808] sm:$0xff]
        %v477 = vld [vmem:[#allocation7 + $0x810] sm:$0xff]
        %v478 = vld [vmem:[#allocation7 + $0x818] sm:$0xff]
        %v479 = vld [vmem:[#allocation7 + $0x28] sm:$0xff]
        %v480 = vld [vmem:[#allocation7 + $0x30] sm:$0xff]
        %v481 = vld [vmem:[#allocation7 + $0x38] sm:$0xff]
        %v482 = vld [vmem:[#allocation7 + $0xb0] sm:$0xff]
        %v483 = vld [vmem:[#allocation7 + $0xb8] sm:$0xff]
        %v484 = vld [vmem:[#allocation7 + $0xc0] sm:$0xff]
        %v485 = vld [vmem:[#allocation7 + $0x138] sm:$0xff]
        %v486 = vld [vmem:[#allocation7 + $0x140] sm:$0xff]
        %v487 = vld [vmem:[#allocation7 + $0x148] sm:$0xff]
        %v488 = vld [vmem:[#allocation7 + $0x1c0] sm:$0xff]
        %v489 = vld [vmem:[#allocation7 + $0x1c8] sm:$0xff]
        %v490 = vld [vmem:[#allocation7 + $0x1d0] sm:$0xff]
        %v491 = vld [vmem:[#allocation7 + $0x248] sm:$0xff]
        %v492 = vld [vmem:[#allocation7 + $0x250] sm:$0xff]
        %v493 = vld [vmem:[#allocation7 + $0x258] sm:$0xff]
        %v494 = vld [vmem:[#allocation7 + $0x2d0] sm:$0xff]
        %v495 = vld [vmem:[#allocation7 + $0x2d8] sm:$0xff]
        %v496 = vld [vmem:[#allocation7 + $0x2e0] sm:$0xff]
        %v497 = vld [vmem:[#allocation7 + $0x358] sm:$0xff]
        %v498 = vld [vmem:[#allocation7 + $0x360] sm:$0xff]
        %v499 = vld [vmem:[#allocation7 + $0x368] sm:$0xff]
        %v500 = vld [vmem:[#allocation7 + $0x3e0] sm:$0xff]
        %v501 = vld [vmem:[#allocation7 + $0x3e8] sm:$0xff]
        %v502 = vld [vmem:[#allocation7 + $0x3f0] sm:$0xff]
        %v503 = vld [vmem:[#allocation7 + $0x468] sm:$0xff]
        %v504 = vld [vmem:[#allocation7 + $0x470] sm:$0xff]
        %v505 = vld [vmem:[#allocation7 + $0x478] sm:$0xff]
        %v506 = vld [vmem:[#allocation7 + $0x4f0] sm:$0xff]
        %v507 = vld [vmem:[#allocation7 + $0x4f8] sm:$0xff]
        %v508 = vld [vmem:[#allocation7 + $0x500] sm:$0xff]
        %v509 = vld [vmem:[#allocation7 + $0x578] sm:$0xff]
        %v510 = vld [vmem:[#allocation7 + $0x580] sm:$0xff]
        %v511 = vld [vmem:[#allocation7 + $0x588] sm:$0xff]
        %v512 = vld [vmem:[#allocation7 + $0x600] sm:$0xff]
        %v513 = vld [vmem:[#allocation7 + $0x608] sm:$0xff]
        %v514 = vld [vmem:[#allocation7 + $0x610] sm:$0xff]
        %v515 = vld [vmem:[#allocation7 + $0x688] sm:$0xff]
        %v516 = vld [vmem:[#allocation7 + $0x690] sm:$0xff]
        %v517 = vld [vmem:[#allocation7 + $0x698] sm:$0xff]
        %v518 = vld [vmem:[#allocation7 + $0x710] sm:$0xff]
        %v519 = vld [vmem:[#allocation7 + $0x718] sm:$0xff]
        %v520 = vld [vmem:[#allocation7 + $0x720] sm:$0xff]
        %v521 = vld [vmem:[#allocation7 + $0x798] sm:$0xff]
        %v522 = vld [vmem:[#allocation7 + $0x7a0] sm:$0xff]
        %v523 = vld [vmem:[#allocation7 + $0x7a8] sm:$0xff]
        %v524 = vld [vmem:[#allocation7 + $0x820] sm:$0xff]
        %v525 = vld [vmem:[#allocation7 + $0x828] sm:$0xff]
        %v526 = vld [vmem:[#allocation7 + $0x830] sm:$0xff]
        %v527 = vld [vmem:[#allocation7 + $0x40] sm:$0xff]
        %v528 = vld [vmem:[#allocation7 + $0x48] sm:$0xff]
        %v529 = vld [vmem:[#allocation7 + $0x50] sm:$0xff]
        %v530 = vld [vmem:[#allocation7 + $0xc8] sm:$0xff]
        %v531 = vld [vmem:[#allocation7 + $0xd0] sm:$0xff]
        %v532 = vld [vmem:[#allocation7 + $0xd8] sm:$0xff]
        %v533 = vld [vmem:[#allocation7 + $0x150] sm:$0xff]
        %v534 = vld [vmem:[#allocation7 + $0x158] sm:$0xff]
        %v535 = vld [vmem:[#allocation7 + $0x160] sm:$0xff]
        %v536 = vld [vmem:[#allocation7 + $0x1d8] sm:$0xff]
        %v537 = vld [vmem:[#allocation7 + $0x1e0] sm:$0xff]
        %v538 = vld [vmem:[#allocation7 + $0x1e8] sm:$0xff]
        %v539 = vld [vmem:[#allocation7 + $0x260] sm:$0xff]
        %v540 = vld [vmem:[#allocation7 + $0x268] sm:$0xff]
        %v541 = vld [vmem:[#allocation7 + $0x270] sm:$0xff]
        %v542 = vld [vmem:[#allocation7 + $0x2e8] sm:$0xff]
        %v543 = vld [vmem:[#allocation7 + $0x2f0] sm:$0xff]
        %v544 = vld [vmem:[#allocation7 + $0x2f8] sm:$0xff]
        %v545 = vld [vmem:[#allocation7 + $0x370] sm:$0xff]
        %v546 = vld [vmem:[#allocation7 + $0x378] sm:$0xff]
        %v547 = vld [vmem:[#allocation7 + $0x380] sm:$0xff]
        %v548 = vld [vmem:[#allocation7 + $0x3f8] sm:$0xff]
        %v549 = vld [vmem:[#allocation7 + $0x400] sm:$0xff]
        %v550 = vld [vmem:[#allocation7 + $0x408] sm:$0xff]
        %v551 = vld [vmem:[#allocation7 + $0x480] sm:$0xff]
        %v552 = vld [vmem:[#allocation7 + $0x488] sm:$0xff]
        %v553 = vld [vmem:[#allocation7 + $0x490] sm:$0xff]
        %v554 = vld [vmem:[#allocation7 + $0x508] sm:$0xff]
        %v555 = vld [vmem:[#allocation7 + $0x510] sm:$0xff]
        %v556 = vld [vmem:[#allocation7 + $0x518] sm:$0xff]
        %v557 = vld [vmem:[#allocation7 + $0x590] sm:$0xff]
        %v558 = vld [vmem:[#allocation7 + $0x598] sm:$0xff]
        %v559 = vld [vmem:[#allocation7 + $0x5a0] sm:$0xff]
        %v560 = vld [vmem:[#allocation7 + $0x618] sm:$0xff]
        %v561 = vld [vmem:[#allocation7 + $0x620] sm:$0xff]
        %v562 = vld [vmem:[#allocation7 + $0x628] sm:$0xff]
        %v563 = vld [vmem:[#allocation7 + $0x6a0] sm:$0xff]
        %v564 = vld [vmem:[#allocation7 + $0x6a8] sm:$0xff]
        %v565 = vld [vmem:[#allocation7 + $0x6b0] sm:$0xff]
        %v566 = vld [vmem:[#allocation7 + $0x728] sm:$0xff]
        %v567 = vld [vmem:[#allocation7 + $0x730] sm:$0xff]
        %v568 = vld [vmem:[#allocation7 + $0x738] sm:$0xff]
        %v569 = vld [vmem:[#allocation7 + $0x7b0] sm:$0xff]
        %v570 = vld [vmem:[#allocation7 + $0x7b8] sm:$0xff]
        %v571 = vld [vmem:[#allocation7 + $0x7c0] sm:$0xff]
        %v572 = vld [vmem:[#allocation7 + $0x838] sm:$0xff]
        %v573 = vld [vmem:[#allocation7 + $0x840] sm:$0xff]
        %v574 = vld [vmem:[#allocation7 + $0x848] sm:$0xff]
        %v575 = vld [vmem:[#allocation7 + $0x58] sm:$0xff]
        %v576 = vld [vmem:[#allocation7 + $0xe0] sm:$0xff]
        %v577 = vld [vmem:[#allocation7 + $0x168] sm:$0xff]
        %v578 = vld [vmem:[#allocation7 + $0x1f0] sm:$0xff]
        %v579 = vld [vmem:[#allocation7 + $0x278] sm:$0xff]
        %v580 = vld [vmem:[#allocation7 + $0x300] sm:$0xff]
        %v581 = vld [vmem:[#allocation7 + $0x388] sm:$0xff]
        %v582 = vld [vmem:[#allocation7 + $0x410] sm:$0xff]
        %v583 = vld [vmem:[#allocation7 + $0x498] sm:$0xff]
        %v584 = vld [vmem:[#allocation7 + $0x520] sm:$0xff]
        %v585 = vld [vmem:[#allocation7 + $0x5a8] sm:$0xff]
        %v586 = vld [vmem:[#allocation7 + $0x630] sm:$0xff]
        %v587 = vld [vmem:[#allocation7 + $0x6b8] sm:$0xff]
        %v588 = vld [vmem:[#allocation7 + $0x740] sm:$0xff]
        %v589 = vld [vmem:[#allocation7 + $0x7c8] sm:$0xff]
        %v590 = vld [vmem:[#allocation7 + $0x850] sm:$0xff]
        %v591 = vld [vmem:[#allocation7 + $0x60] sm:$0xff]
        %v592 = vld [vmem:[#allocation7 + $0x68] sm:$0xff]
        %v593 = vld [vmem:[#allocation7 + $0xe8] sm:$0xff]
        %v594 = vld [vmem:[#allocation7 + $0xf0] sm:$0xff]
        %v595 = vld [vmem:[#allocation7 + $0x170] sm:$0xff]
        %v596 = vld [vmem:[#allocation7 + $0x178] sm:$0xff]
        %v597 = vld [vmem:[#allocation7 + $0x1f8] sm:$0xff]
        %v598 = vld [vmem:[#allocation7 + $0x200] sm:$0xff]
        %v599 = vld [vmem:[#allocation7 + $0x280] sm:$0xff]
        %v600 = vld [vmem:[#allocation7 + $0x288] sm:$0xff]
        %v601 = vld [vmem:[#allocation7 + $0x308] sm:$0xff]
        %v602 = vld [vmem:[#allocation7 + $0x310] sm:$0xff]
        %v603 = vld [vmem:[#allocation7 + $0x390] sm:$0xff]
        %v604 = vld [vmem:[#allocation7 + $0x398] sm:$0xff]
        %v605 = vld [vmem:[#allocation7 + $0x418] sm:$0xff]
        %v606 = vld [vmem:[#allocation7 + $0x420] sm:$0xff]
        %v607 = vld [vmem:[#allocation7 + $0x4a0] sm:$0xff]
        %v608 = vld [vmem:[#allocation7 + $0x4a8] sm:$0xff]
        %v609 = vld [vmem:[#allocation7 + $0x528] sm:$0xff]
        %v610 = vld [vmem:[#allocation7 + $0x530] sm:$0xff]
        %v611 = vld [vmem:[#allocation7 + $0x5b0] sm:$0xff]
        %v612 = vld [vmem:[#allocation7 + $0x5b8] sm:$0xff]
        %v613 = vld [vmem:[#allocation7 + $0x638] sm:$0xff]
        %v614 = vld [vmem:[#allocation7 + $0x640] sm:$0xff]
        %v615 = vld [vmem:[#allocation7 + $0x6c0] sm:$0xff]
        %v616 = vld [vmem:[#allocation7 + $0x6c8] sm:$0xff]
        %v617 = vld [vmem:[#allocation7 + $0x748] sm:$0xff]
        %v618 = vld [vmem:[#allocation7 + $0x750] sm:$0xff]
        %v619 = vld [vmem:[#allocation7 + $0x7d0] sm:$0xff]
        %v620 = vld [vmem:[#allocation7 + $0x7d8] sm:$0xff]
        %v621 = vld [vmem:[#allocation7 + $0x858] sm:$0xff]
        %v622 = vld [vmem:[#allocation7 + $0x860] sm:$0xff]
        %v623 = vld [vmem:[#allocation7 + $0x70] sm:$0xff]
        %v624 = vld [vmem:[#allocation7 + $0xf8] sm:$0xff]
        %v625 = vld [vmem:[#allocation7 + $0x180] sm:$0xff]
        %v626 = vld [vmem:[#allocation7 + $0x208] sm:$0xff]
        %v627 = vld [vmem:[#allocation7 + $0x290] sm:$0xff]
        %v628 = vld [vmem:[#allocation7 + $0x318] sm:$0xff]
        %v629 = vld [vmem:[#allocation7 + $0x3a0] sm:$0xff]
        %v630 = vld [vmem:[#allocation7 + $0x428] sm:$0xff]
        %v631 = vld [vmem:[#allocation7 + $0x4b0] sm:$0xff]
        %v632 = vld [vmem:[#allocation7 + $0x538] sm:$0xff]
        %v633 = vld [vmem:[#allocation7 + $0x5c0] sm:$0xff]
        %v634 = vld [vmem:[#allocation7 + $0x648] sm:$0xff]
        %v635 = vld [vmem:[#allocation7 + $0x6d0] sm:$0xff]
        %v636 = vld [vmem:[#allocation7 + $0x758] sm:$0xff]
        %v637 = vld [vmem:[#allocation7 + $0x7e0] sm:$0xff]
        %v638 = vld [vmem:[#allocation7 + $0x868] sm:$0xff]
        %v639 = vld [vmem:[#allocation7 + $0x78] sm:$0xff]
        %v640 = vld [vmem:[#allocation7 + $0x100] sm:$0xff]
        %v641 = vld [vmem:[#allocation7 + $0x188] sm:$0xff]
        %v642 = vld [vmem:[#allocation7 + $0x210] sm:$0xff]
        %v643 = vld [vmem:[#allocation7 + $0x298] sm:$0xff]
        %v644 = vld [vmem:[#allocation7 + $0x320] sm:$0xff]
        %v645 = vld [vmem:[#allocation7 + $0x3a8] sm:$0xff]
        %v646 = vld [vmem:[#allocation7 + $0x430] sm:$0xff]
        %v647 = vld [vmem:[#allocation7 + $0x4b8] sm:$0xff]
        %v648 = vld [vmem:[#allocation7 + $0x540] sm:$0xff]
        %v649 = vld [vmem:[#allocation7 + $0x5c8] sm:$0xff]
        %v650 = vld [vmem:[#allocation7 + $0x650] sm:$0xff]
        %v651 = vld [vmem:[#allocation7 + $0x6d8] sm:$0xff]
        %v652 = vld [vmem:[#allocation7 + $0x760] sm:$0xff]
        %v653 = vld [vmem:[#allocation7 + $0x7e8] sm:$0xff]
        %v654 = vld [vmem:[#allocation7 + $0x870] sm:$0xff]
        %v655 = vld [vmem:[#allocation7 + $0x80] sm:$0xff]
        %v656 = vld [vmem:[#allocation7 + $0x108] sm:$0xff]
        %v657 = vld [vmem:[#allocation7 + $0x190] sm:$0xff]
        %v658 = vld [vmem:[#allocation7 + $0x218] sm:$0xff]
        %v659 = vld [vmem:[#allocation7 + $0x2a0] sm:$0xff]
        %v660 = vld [vmem:[#allocation7 + $0x328] sm:$0xff]
        %v661 = vld [vmem:[#allocation7 + $0x3b0] sm:$0xff]
        %v662 = vld [vmem:[#allocation7 + $0x438] sm:$0xff]
        %v663 = vld [vmem:[#allocation7 + $0x4c0] sm:$0xff]
        %v664 = vld [vmem:[#allocation7 + $0x548] sm:$0xff]
        %v665 = vld [vmem:[#allocation7 + $0x5d0] sm:$0xff]
        %v666 = vld [vmem:[#allocation7 + $0x658] sm:$0xff]
        %v667 = vld [vmem:[#allocation7 + $0x6e0] sm:$0xff]
        %v668 = vld [vmem:[#allocation7 + $0x768] sm:$0xff]
        %v669 = vld [vmem:[#allocation7 + $0x7f0] sm:$0xff]
        %v670 = vld [vmem:[#allocation7 + $0x878] sm:$0xff]
        %v671 = vld [vmem:[#allocation8] sm:$0x3]
        %v672 = vld [vmem:[#allocation8 + $0x2] sm:$0x1]
        %v673 = vld [vmem:[#allocation8 + $0x3] sm:$0x1]
        %v674 = vld [vmem:[#allocation8 + $0x4] sm:$0x7]
        %v675 = vld [vmem:[#allocation8 + $0x7] sm:$0x7]
        %v676 = vld [vmem:[#allocation8 + $0xa] sm:$0x1]
        %v677 = vld [vmem:[#allocation8 + $0xb] sm:$0x3]
        %v678 = vld [vmem:[#allocation8 + $0xd] sm:$0x1]
        %v679 = vld [vmem:[#allocation8 + $0xe] sm:$0x1]
        %v680 = vld [vmem:[%s394] sm:$0xff]
        %v681 = vld [vmem:[%s398] sm:$0xff]
        %v682 = vld [vmem:[%s336] sm:$0x1]
        %v683 = vld [vmem:[%s328] sm:$0xff]
        %v685 = vlaneseq
        %v686 = vshrl.u32 %v685, 7
        %v687 = vsub.s32 0, %v686
        %v688 = vrot.slane %v671, %v687
        %v689 = vlaneseq
        %v690 = vshrl.u32 %v689, 7
        %v691 = vsub.s32 1, %v690
        %v692 = vrot.slane %v671, %v691
        %695 = vmatprep.subr.mxu0 %v400
        %696 = vmatpush1.msra.mxu0 %v399
        %697 = vmatprep.subr.mxu0 %v402
        %698 = vmatpush1.msra.mxu0 %v401
        %699 = vmatprep.subr.mxu0 %v404
        %700 = vmatpush1.msra.mxu0 %v403
        %701 = vmatprep.subr.mxu0 %v406
        %702 = vmatpush1.msra.mxu0 %v405
        %703 = vmatprep.subr.mxu0 %v408
        %704 = vmatpush1.msra.mxu0 %v407
        %705 = vmatprep.subr.mxu0 %v410
        %706 = vmatpush1.msra.mxu0 %v409
        %707 = vmatprep.subr.mxu0 %v412
        %708 = vmatpush1.msra.mxu0 %v411
        %709 = vmatprep.subr.mxu0 %v414
        %710 = vmatpush1.msra.mxu0 %v413
        %711 = vmatprep.subr.mxu0 %v416
        %712 = vmatpush1.msra.mxu0 %v415
        %713 = vmatprep.subr.mxu0 %v418
        %714 = vmatpush1.msra.mxu0 %v417
        %715 = vmatprep.subr.mxu0 %v420
        %716 = vmatpush1.msra.mxu0 %v419
        %717 = vmatprep.subr.mxu0 %v422
        %718 = vmatpush1.msra.mxu0 %v421
        %719 = vmatprep.subr.mxu0 %v424
        %720 = vmatpush1.msra.mxu0 %v423
        %721 = vmatprep.subr.mxu0 %v426
        %722 = vmatpush1.msra.mxu0 %v425
        %723 = vmatprep.subr.mxu0 %v428
        %724 = vmatpush1.msra.mxu0 %v427
        %725 = vmatprep.subr.mxu0 %v430
        %726 = vmatpush1.msra.mxu0 %v429
        %727 = vmatprep.subr.mxu0 0.0
        %728 = vmatpush1.msra.mxu0 0.0
        %729 = vmatprep.subr.mxu0 0.0
        %730 = vmatpush1.msra.mxu0 0.0
        %731 = vmatprep.subr.mxu0 0.0
        %732 = vmatpush1.msra.mxu0 0.0
        %733 = vmatprep.subr.mxu0 0.0
        %734 = vmatpush1.msra.mxu0 0.0
        %735 = vmatprep.subr.mxu0 0.0
        %736 = vmatpush1.msra.mxu0 0.0
        %737 = vmatprep.subr.mxu0 0.0
        %738 = vmatpush1.msra.mxu0 0.0
        %739 = vmatprep.subr.mxu0 0.0
        %740 = vmatpush1.msra.mxu0 0.0
        %741 = vmatprep.subr.mxu0 0.0
        %742 = vmatpush1.msra.mxu0 0.0
        %743 = vmatprep.subr.mxu0 0.0
        %744 = vmatpush1.msra.mxu0 0.0
        %745 = vmatprep.subr.mxu0 0.0
        %746 = vmatpush1.msra.mxu0 0.0
        %747 = vmatprep.subr.mxu0 0.0
        %748 = vmatpush1.msra.mxu0 0.0
        %749 = vmatprep.subr.mxu0 0.0
        %750 = vmatpush1.msra.mxu0 0.0
        %751 = vmatprep.subr.mxu0 0.0
        %752 = vmatpush1.msra.mxu0 0.0
        %753 = vmatprep.subr.mxu0 0.0
        %754 = vmatpush1.msra.mxu0 0.0
        %755 = vmatprep.subr.mxu0 0.0
        %756 = vmatpush1.msra.mxu0 0.0
        %757 = vmatprep.subr.mxu0 0.0
        %758 = vmatpush1.msra.mxu0 0.0
        %759 = vmatprep.mubr.f32.mxu0 0.0
        %760 = vmatmul.mubr.f32.gmra.mrb[0].mxu0 %v683
        %v761 = vpop.f32.mrb[0].mxu0
        %v762 = vadd.f32 %v688, %v761
        %v763 = vpop.f32.mrb[0].mxu0
        %v764 = vadd.f32 %v692, %v763
        %765 = vdwg.mxu0
        %v767 = vlaneseq
        %v768 = vshrl.u32 %v767, 7
        %v769 = vsub.s32 0, %v768
        %v770 = vrot.slane %v672, %v769
        %vm772 = vcmask 64512
        %v774 = vsel %vm772, %v680, 0
        %776 = vmatprep.subr.mxu0 0.0
        %777 = vmatpush1.msra.mxu0 %v762
        %778 = vmatprep.subr.mxu0 0.0
        %779 = vmatpush1.msra.mxu0 0.0
        %780 = vmatprep.subr.mxu0 0.0
        %781 = vmatpush1.msra.mxu0 0.0
        %782 = vmatprep.subr.mxu0 0.0
        %783 = vmatpush1.msra.mxu0 0.0
        %784 = vmatprep.subr.mxu0 0.0
        %785 = vmatpush1.msra.mxu0 0.0
        %786 = vmatprep.subr.mxu0 0.0
        %787 = vmatpush1.msra.mxu0 0.0
        %788 = vmatprep.subr.mxu0 0.0
        %789 = vmatpush1.msra.mxu0 0.0
        %790 = vmatprep.subr.mxu0 0.0
        %791 = vmatpush1.msra.mxu0 0.0
        %792 = vmatprep.subr.mxu0 0.0
        %793 = vmatpush1.msra.mxu0 0.0
        %794 = vmatprep.subr.mxu0 0.0
        %795 = vmatpush1.msra.mxu0 0.0
        %796 = vmatprep.subr.mxu0 0.0
        %797 = vmatpush1.msra.mxu0 0.0
        %798 = vmatprep.subr.mxu0 0.0
        %799 = vmatpush1.msra.mxu0 0.0
        %800 = vmatprep.subr.mxu0 0.0
        %801 = vmatpush1.msra.mxu0 0.0
        %802 = vmatprep.subr.mxu0 0.0
        %803 = vmatpush1.msra.mxu0 0.0
        %804 = vmatprep.subr.mxu0 0.0
        %805 = vmatpush1.msra.mxu0 0.0
        %806 = vmatprep.subr.mxu0 0.0
        %807 = vmatpush1.msra.mxu0 0.0
        %808 = vmatprep.subr.mxu0 0.0
        %809 = vmatpush1.msra.mxu0 0.0
        %810 = vmatprep.subr.mxu0 0.0
        %811 = vmatpush1.msra.mxu0 0.0
        %812 = vmatprep.subr.mxu0 0.0
        %813 = vmatpush1.msra.mxu0 0.0
        %814 = vmatprep.subr.mxu0 0.0
        %815 = vmatpush1.msra.mxu0 0.0
        %816 = vmatprep.subr.mxu0 0.0
        %817 = vmatpush1.msra.mxu0 0.0
        %818 = vmatprep.subr.mxu0 0.0
        %819 = vmatpush1.msra.mxu0 0.0
        %820 = vmatprep.subr.mxu0 0.0
        %821 = vmatpush1.msra.mxu0 0.0
        %822 = vmatprep.subr.mxu0 0.0
        %823 = vmatpush1.msra.mxu0 0.0
        %824 = vmatprep.subr.mxu0 0.0
        %825 = vmatpush1.msra.mxu0 0.0
        %826 = vmatprep.subr.mxu0 0.0
        %827 = vmatpush1.msra.mxu0 0.0
        %828 = vmatprep.subr.mxu0 0.0
        %829 = vmatpush1.msra.mxu0 0.0
        %830 = vmatprep.subr.mxu0 0.0
        %831 = vmatpush1.msra.mxu0 0.0
        %832 = vmatprep.subr.mxu0 0.0
        %833 = vmatpush1.msra.mxu0 0.0
        %834 = vmatprep.subr.mxu0 0.0
        %835 = vmatpush1.msra.mxu0 0.0
        %836 = vmatprep.subr.mxu0 0.0
        %837 = vmatpush1.msra.mxu0 0.0
        %838 = vmatprep.subr.mxu0 0.0
        %839 = vmatpush1.msra.mxu0 0.0
        %840 = vmatprep.mubr.f32.mxu0 0.0
        %841 = vmatmul.mubr.f32.gmra.mrb[0].mxu0 %v774
        %v842 = vpop.f32.mrb[0].mxu0
        %v843 = vadd.f32 %v770, %v842
        %v844 = vpop.f32.mrb[0].mxu0
        %845 = vdwg.mxu0
        %v847 = vlaneseq
        %v848 = vshrl.u32 %v847, 7
        %v849 = vsub.s32 0, %v848
        %v850 = vrot.slane %v673, %v849
        %v853 = vsel %vm772, %v681, 0
        %855 = vmatprep.subr.mxu0 0.0
        %856 = vmatpush1.msra.mxu0 %v764
        %857 = vmatprep.subr.mxu0 0.0
        %858 = vmatpush1.msra.mxu0 0.0
        %859 = vmatprep.subr.mxu0 0.0
        %860 = vmatpush1.msra.mxu0 0.0
        %861 = vmatprep.subr.mxu0 0.0
        %862 = vmatpush1.msra.mxu0 0.0
        %863 = vmatprep.subr.mxu0 0.0
        %864 = vmatpush1.msra.mxu0 0.0
        %865 = vmatprep.subr.mxu0 0.0
        %866 = vmatpush1.msra.mxu0 0.0
        %867 = vmatprep.subr.mxu0 0.0
        %868 = vmatpush1.msra.mxu0 0.0
        %869 = vmatprep.subr.mxu0 0.0
        %870 = vmatpush1.msra.mxu0 0.0
        %871 = vmatprep.subr.mxu0 0.0
        %872 = vmatpush1.msra.mxu0 0.0
        %873 = vmatprep.subr.mxu0 0.0
        %874 = vmatpush1.msra.mxu0 0.0
        %875 = vmatprep.subr.mxu0 0.0
        %876 = vmatpush1.msra.mxu0 0.0
        %877 = vmatprep.subr.mxu0 0.0
        %878 = vmatpush1.msra.mxu0 0.0
        %879 = vmatprep.subr.mxu0 0.0
        %880 = vmatpush1.msra.mxu0 0.0
        %881 = vmatprep.subr.mxu0 0.0
        %882 = vmatpush1.msra.mxu0 0.0
        %883 = vmatprep.subr.mxu0 0.0
        %884 = vmatpush1.msra.mxu0 0.0
        %885 = vmatprep.subr.mxu0 0.0
        %886 = vmatpush1.msra.mxu0 0.0
        %887 = vmatprep.subr.mxu0 0.0
        %888 = vmatpush1.msra.mxu0 0.0
        %889 = vmatprep.subr.mxu0 0.0
        %890 = vmatpush1.msra.mxu0 0.0
        %891 = vmatprep.subr.mxu0 0.0
        %892 = vmatpush1.msra.mxu0 0.0
        %893 = vmatprep.subr.mxu0 0.0
        %894 = vmatpush1.msra.mxu0 0.0
        %895 = vmatprep.subr.mxu0 0.0
        %896 = vmatpush1.msra.mxu0 0.0
        %897 = vmatprep.subr.mxu0 0.0
        %898 = vmatpush1.msra.mxu0 0.0
        %899 = vmatprep.subr.mxu0 0.0
        %900 = vmatpush1.msra.mxu0 0.0
        %901 = vmatprep.subr.mxu0 0.0
        %902 = vmatpush1.msra.mxu0 0.0
        %903 = vmatprep.subr.mxu0 0.0
        %904 = vmatpush1.msra.mxu0 0.0
        %905 = vmatprep.subr.mxu0 0.0
        %906 = vmatpush1.msra.mxu0 0.0
        %907 = vmatprep.subr.mxu0 0.0
        %908 = vmatpush1.msra.mxu0 0.0
        %909 = vmatprep.subr.mxu0 0.0
        %910 = vmatpush1.msra.mxu0 0.0
        %911 = vmatprep.subr.mxu0 0.0
        %912 = vmatpush1.msra.mxu0 0.0
        %913 = vmatprep.subr.mxu0 0.0
        %914 = vmatpush1.msra.mxu0 0.0
        %915 = vmatprep.subr.mxu0 0.0
        %916 = vmatpush1.msra.mxu0 0.0
        %917 = vmatprep.subr.mxu0 0.0
        %918 = vmatpush1.msra.mxu0 0.0
        %919 = vmatprep.mubr.f32.mxu0 0.0
        %920 = vmatmul.mubr.f32.gmra.mrb[0].mxu0 %v853
        %v921 = vpop.f32.mrb[0].mxu0
        %v922 = vadd.f32 %v850, %v921
        %v923 = vpop.f32.mrb[0].mxu0
        %924 = vdwg.mxu0
        %925 = vmatprep.subr.mxu0 %v528
        %926 = vmatpush1.msra.mxu0 %v527
        %927 = vmatprep.subr.mxu0 %v531
        %928 = vmatpush1.msra.mxu0 %v530
        %929 = vmatprep.subr.mxu0 %v534
        %930 = vmatpush1.msra.mxu0 %v533
        %931 = vmatprep.subr.mxu0 %v537
        %932 = vmatpush1.msra.mxu0 %v536
        %933 = vmatprep.subr.mxu0 %v540
        %934 = vmatpush1.msra.mxu0 %v539
        %935 = vmatprep.subr.mxu0 %v543
        %936 = vmatpush1.msra.mxu0 %v542
        %937 = vmatprep.subr.mxu0 %v546
        %938 = vmatpush1.msra.mxu0 %v545
        %939 = vmatprep.subr.mxu0 %v549
        %940 = vmatpush1.msra.mxu0 %v548
        %941 = vmatprep.subr.mxu0 %v552
        %942 = vmatpush1.msra.mxu0 %v551
        %943 = vmatprep.subr.mxu0 %v555
        %944 = vmatpush1.msra.mxu0 %v554
        %945 = vmatprep.subr.mxu0 %v558
        %946 = vmatpush1.msra.mxu0 %v557
        %947 = vmatprep.subr.mxu0 %v561
        %948 = vmatpush1.msra.mxu0 %v560
        %949 = vmatprep.subr.mxu0 %v564
        %950 = vmatpush1.msra.mxu0 %v563
        %951 = vmatprep.subr.mxu0 %v567
        %952 = vmatpush1.msra.mxu0 %v566
        %953 = vmatprep.subr.mxu0 %v570
        %954 = vmatpush1.msra.mxu0 %v569
        %955 = vmatprep.subr.mxu0 %v573
        %956 = vmatpush1.msra.mxu0 %v572
        %957 = vmatprep.subr.mxu0 0.0
        %958 = vmatpush1.msra.mxu0 0.0
        %959 = vmatprep.subr.mxu0 0.0
        %960 = vmatpush1.msra.mxu0 0.0
        %961 = vmatprep.subr.mxu0 0.0
        %962 = vmatpush1.msra.mxu0 0.0
        %963 = vmatprep.subr.mxu0 0.0
        %964 = vmatpush1.msra.mxu0 0.0
        %965 = vmatprep.subr.mxu0 0.0
        %966 = vmatpush1.msra.mxu0 0.0
        %967 = vmatprep.subr.mxu0 0.0
        %968 = vmatpush1.msra.mxu0 0.0
        %969 = vmatprep.subr.mxu0 0.0
        %970 = vmatpush1.msra.mxu0 0.0
        %971 = vmatprep.subr.mxu0 0.0
        %972 = vmatpush1.msra.mxu0 0.0
        %973 = vmatprep.subr.mxu0 0.0
        %974 = vmatpush1.msra.mxu0 0.0
        %975 = vmatprep.subr.mxu0 0.0
        %976 = vmatpush1.msra.mxu0 0.0
        %977 = vmatprep.subr.mxu0 0.0
        %978 = vmatpush1.msra.mxu0 0.0
        %979 = vmatprep.subr.mxu0 0.0
        %980 = vmatpush1.msra.mxu0 0.0
        %981 = vmatprep.subr.mxu0 0.0
        %982 = vmatpush1.msra.mxu0 0.0
        %983 = vmatprep.subr.mxu0 0.0
        %984 = vmatpush1.msra.mxu0 0.0
        %985 = vmatprep.subr.mxu0 0.0
        %986 = vmatpush1.msra.mxu0 0.0
        %987 = vmatprep.subr.mxu0 0.0
        %988 = vmatpush1.msra.mxu0 0.0
        %989 = vmatprep.mubr.f32.mxu0 0.0
        %990 = vmatmul.mubr.f32.gmra.mrb[0].mxu0 %v922
        %v991 = vpop.f32.mrb[0].mxu0
        %v992 = vadd.f32 0.0, %v991
        %v993 = vpop.f32.mrb[0].mxu0
        %v994 = vadd.f32 0.0, %v993
        %995 = vdwg.mxu0
        %996 = vmatprep.subr.mxu0 0.0
        %997 = vmatpush1.msra.mxu0 %v529
        %998 = vmatprep.subr.mxu0 0.0
        %999 = vmatpush1.msra.mxu0 %v532
        %1000 = vmatprep.subr.mxu0 0.0
        %1001 = vmatpush1.msra.mxu0 %v535
        %1002 = vmatprep.subr.mxu0 0.0
        %1003 = vmatpush1.msra.mxu0 %v538
        %1004 = vmatprep.subr.mxu0 0.0
        %1005 = vmatpush1.msra.mxu0 %v541
        %1006 = vmatprep.subr.mxu0 0.0
        %1007 = vmatpush1.msra.mxu0 %v544
        %1008 = vmatprep.subr.mxu0 0.0
        %1009 = vmatpush1.msra.mxu0 %v547
        %1010 = vmatprep.subr.mxu0 0.0
        %1011 = vmatpush1.msra.mxu0 %v550
        %1012 = vmatprep.subr.mxu0 0.0
        %1013 = vmatpush1.msra.mxu0 %v553
        %1014 = vmatprep.subr.mxu0 0.0
        %1015 = vmatpush1.msra.mxu0 %v556
        %1016 = vmatprep.subr.mxu0 0.0
        %1017 = vmatpush1.msra.mxu0 %v559
        %1018 = vmatprep.subr.mxu0 0.0
        %1019 = vmatpush1.msra.mxu0 %v562
        %1020 = vmatprep.subr.mxu0 0.0
        %1021 = vmatpush1.msra.mxu0 %v565
        %1022 = vmatprep.subr.mxu0 0.0
        %1023 = vmatpush1.msra.mxu0 %v568
        %1024 = vmatprep.subr.mxu0 0.0
        %1025 = vmatpush1.msra.mxu0 %v571
        %1026 = vmatprep.subr.mxu0 0.0
        %1027 = vmatpush1.msra.mxu0 %v574
        %1028 = vmatprep.subr.mxu0 0.0
        %1029 = vmatpush1.msra.mxu0 0.0
        %1030 = vmatprep.subr.mxu0 0.0
        %1031 = vmatpush1.msra.mxu0 0.0
        %1032 = vmatprep.subr.mxu0 0.0
        %1033 = vmatpush1.msra.mxu0 0.0
        %1034 = vmatprep.subr.mxu0 0.0
        %1035 = vmatpush1.msra.mxu0 0.0
        %1036 = vmatprep.subr.mxu0 0.0
        %1037 = vmatpush1.msra.mxu0 0.0
        %1038 = vmatprep.subr.mxu0 0.0
        %1039 = vmatpush1.msra.mxu0 0.0
        %1040 = vmatprep.subr.mxu0 0.0
        %1041 = vmatpush1.msra.mxu0 0.0
        %1042 = vmatprep.subr.mxu0 0.0
        %1043 = vmatpush1.msra.mxu0 0.0
        %1044 = vmatprep.subr.mxu0 0.0
        %1045 = vmatpush1.msra.mxu0 0.0
        %1046 = vmatprep.subr.mxu0 0.0
        %1047 = vmatpush1.msra.mxu0 0.0
        %1048 = vmatprep.subr.mxu0 0.0
        %1049 = vmatpush1.msra.mxu0 0.0
        %1050 = vmatprep.subr.mxu0 0.0
        %1051 = vmatpush1.msra.mxu0 0.0
        %1052 = vmatprep.subr.mxu0 0.0
        %1053 = vmatpush1.msra.mxu0 0.0
        %1054 = vmatprep.subr.mxu0 0.0
        %1055 = vmatpush1.msra.mxu0 0.0
        %1056 = vmatprep.subr.mxu0 0.0
        %1057 = vmatpush1.msra.mxu0 0.0
        %1058 = vmatprep.subr.mxu0 0.0
        %1059 = vmatpush1.msra.mxu0 0.0
        %1060 = vmatprep.mubr.f32.mxu0 0.0
        %1061 = vmatmul.mubr.f32.gmra.mrb[0].mxu0 %v922
        %v1062 = vpop.f32.mrb[0].mxu0
        %v1063 = vadd.f32 0.0, %v1062
        %v1064 = vpop.f32.mrb[0].mxu0
        %1065 = vdwg.mxu0
        %1066 = vmatprep.subr.mxu0 %v480
        %1067 = vmatpush1.msra.mxu0 %v479
        %1068 = vmatprep.subr.mxu0 %v483
        %1069 = vmatpush1.msra.mxu0 %v482
        %1070 = vmatprep.subr.mxu0 %v486
        %1071 = vmatpush1.msra.mxu0 %v485
        %1072 = vmatprep.subr.mxu0 %v489
        %1073 = vmatpush1.msra.mxu0 %v488
        %1074 = vmatprep.subr.mxu0 %v492
        %1075 = vmatpush1.msra.mxu0 %v491
        %1076 = vmatprep.subr.mxu0 %v495
        %1077 = vmatpush1.msra.mxu0 %v494
        %1078 = vmatprep.subr.mxu0 %v498
        %1079 = vmatpush1.msra.mxu0 %v497
        %1080 = vmatprep.subr.mxu0 %v501
        %1081 = vmatpush1.msra.mxu0 %v500
        %1082 = vmatprep.subr.mxu0 %v504
        %1083 = vmatpush1.msra.mxu0 %v503
        %1084 = vmatprep.subr.mxu0 %v507
        %1085 = vmatpush1.msra.mxu0 %v506
        %1086 = vmatprep.subr.mxu0 %v510
        %1087 = vmatpush1.msra.mxu0 %v509
        %1088 = vmatprep.subr.mxu0 %v513
        %1089 = vmatpush1.msra.mxu0 %v512
        %1090 = vmatprep.subr.mxu0 %v516
        %1091 = vmatpush1.msra.mxu0 %v515
        %1092 = vmatprep.subr.mxu0 %v519
        %1093 = vmatpush1.msra.mxu0 %v518
        %1094 = vmatprep.subr.mxu0 %v522
        %1095 = vmatpush1.msra.mxu0 %v521
        %1096 = vmatprep.subr.mxu0 %v525
        %1097 = vmatpush1.msra.mxu0 %v524
        %1098 = vmatprep.subr.mxu0 0.0
        %1099 = vmatpush1.msra.mxu0 0.0
        %1100 = vmatprep.subr.mxu0 0.0
        %1101 = vmatpush1.msra.mxu0 0.0
        %1102 = vmatprep.subr.mxu0 0.0
        %1103 = vmatpush1.msra.mxu0 0.0
        %1104 = vmatprep.subr.mxu0 0.0
        %1105 = vmatpush1.msra.mxu0 0.0
        %1106 = vmatprep.subr.mxu0 0.0
        %1107 = vmatpush1.msra.mxu0 0.0
        %1108 = vmatprep.subr.mxu0 0.0
        %1109 = vmatpush1.msra.mxu0 0.0
        %1110 = vmatprep.subr.mxu0 0.0
        %1111 = vmatpush1.msra.mxu0 0.0
        %1112 = vmatprep.subr.mxu0 0.0
        %1113 = vmatpush1.msra.mxu0 0.0
        %1114 = vmatprep.subr.mxu0 0.0
        %1115 = vmatpush1.msra.mxu0 0.0
        %1116 = vmatprep.subr.mxu0 0.0
        %1117 = vmatpush1.msra.mxu0 0.0
        %1118 = vmatprep.subr.mxu0 0.0
        %1119 = vmatpush1.msra.mxu0 0.0
        %1120 = vmatprep.subr.mxu0 0.0
        %1121 = vmatpush1.msra.mxu0 0.0
        %1122 = vmatprep.subr.mxu0 0.0
        %1123 = vmatpush1.msra.mxu0 0.0
        %1124 = vmatprep.subr.mxu0 0.0
        %1125 = vmatpush1.msra.mxu0 0.0
        %1126 = vmatprep.subr.mxu0 0.0
        %1127 = vmatpush1.msra.mxu0 0.0
        %1128 = vmatprep.subr.mxu0 0.0
        %1129 = vmatpush1.msra.mxu0 0.0
        %1130 = vmatprep.mubr.f32.mxu0 0.0
        %1131 = vmatmul.mubr.f32.gmra.mrb[0].mxu0 %v843
        %v1132 = vpop.f32.mrb[0].mxu0
        %v1133 = vadd.f32 %v992, %v1132
        %v1134 = vpop.f32.mrb[0].mxu0
        %v1135 = vadd.f32 %v994, %v1134
        %1136 = vdwg.mxu0
        %1137 = vmatprep.subr.mxu0 0.0
        %1138 = vmatpush1.msra.mxu0 %v481
        %1139 = vmatprep.subr.mxu0 0.0
        %1140 = vmatpush1.msra.mxu0 %v484
        %1141 = vmatprep.subr.mxu0 0.0
        %1142 = vmatpush1.msra.mxu0 %v487
        %1143 = vmatprep.subr.mxu0 0.0
        %1144 = vmatpush1.msra.mxu0 %v490
        %1145 = vmatprep.subr.mxu0 0.0
        %1146 = vmatpush1.msra.mxu0 %v493
        %1147 = vmatprep.subr.mxu0 0.0
        %1148 = vmatpush1.msra.mxu0 %v496
        %1149 = vmatprep.subr.mxu0 0.0
        %1150 = vmatpush1.msra.mxu0 %v499
        %1151 = vmatprep.subr.mxu0 0.0
        %1152 = vmatpush1.msra.mxu0 %v502
        %1153 = vmatprep.subr.mxu0 0.0
        %1154 = vmatpush1.msra.mxu0 %v505
        %1155 = vmatprep.subr.mxu0 0.0
        %1156 = vmatpush1.msra.mxu0 %v508
        %1157 = vmatprep.subr.mxu0 0.0
        %1158 = vmatpush1.msra.mxu0 %v511
        %1159 = vmatprep.subr.mxu0 0.0
        %1160 = vmatpush1.msra.mxu0 %v514
        %1161 = vmatprep.subr.mxu0 0.0
        %1162 = vmatpush1.msra.mxu0 %v517
        %1163 = vmatprep.subr.mxu0 0.0
        %1164 = vmatpush1.msra.mxu0 %v520
        %1165 = vmatprep.subr.mxu0 0.0
        %1166 = vmatpush1.msra.mxu0 %v523
        %1167 = vmatprep.subr.mxu0 0.0
        %1168 = vmatpush1.msra.mxu0 %v526
        %1169 = vmatprep.subr.mxu0 0.0
        %1170 = vmatpush1.msra.mxu0 0.0
        %1171 = vmatprep.subr.mxu0 0.0
        %1172 = vmatpush1.msra.mxu0 0.0
        %1173 = vmatprep.subr.mxu0 0.0
        %1174 = vmatpush1.msra.mxu0 0.0
        %1175 = vmatprep.subr.mxu0 0.0
        %1176 = vmatpush1.msra.mxu0 0.0
        %1177 = vmatprep.subr.mxu0 0.0
        %1178 = vmatpush1.msra.mxu0 0.0
        %1179 = vmatprep.subr.mxu0 0.0
        %1180 = vmatpush1.msra.mxu0 0.0
        %1181 = vmatprep.subr.mxu0 0.0
        %1182 = vmatpush1.msra.mxu0 0.0
        %1183 = vmatprep.subr.mxu0 0.0
        %1184 = vmatpush1.msra.mxu0 0.0
        %1185 = vmatprep.subr.mxu0 0.0
        %1186 = vmatpush1.msra.mxu0 0.0
        %1187 = vmatprep.subr.mxu0 0.0
        %1188 = vmatpush1.msra.mxu0 0.0
        %1189 = vmatprep.subr.mxu0 0.0
        %1190 = vmatpush1.msra.mxu0 0.0
        %1191 = vmatprep.subr.mxu0 0.0
        %1192 = vmatpush1.msra.mxu0 0.0
        %1193 = vmatprep.subr.mxu0 0.0
        %1194 = vmatpush1.msra.mxu0 0.0
        %1195 = vmatprep.subr.mxu0 0.0
        %1196 = vmatpush1.msra.mxu0 0.0
        %1197 = vmatprep.subr.mxu0 0.0
        %1198 = vmatpush1.msra.mxu0 0.0
        %1199 = vmatprep.subr.mxu0 0.0
        %1200 = vmatpush1.msra.mxu0 0.0
        %1201 = vmatprep.mubr.f32.mxu0 0.0
        %1202 = vmatmul.mubr.f32.gmra.mrb[0].mxu0 %v843
        %v1203 = vpop.f32.mrb[0].mxu0
        %v1204 = vadd.f32 %v1063, %v1203
        %v1205 = vpop.f32.mrb[0].mxu0
        %1206 = vdwg.mxu0
        %v1208 = vlaneseq
        %v1209 = vshrl.u32 %v1208, 7
        %v1210 = vsub.s32 0, %v1209
        %v1211 = vrot.slane %v674, %v1210
        %v1212 = vlaneseq
        %v1213 = vshrl.u32 %v1212, 7
        %v1214 = vsub.s32 1, %v1213
        %v1215 = vrot.slane %v674, %v1214
        %v1216 = vlaneseq
        %v1217 = vshrl.u32 %v1216, 7
        %v1218 = vsub.s32 2, %v1217
        %v1219 = vrot.slane %v674, %v1218
        %v1223 = vadd.f32 %v1133, %v1211
        %v1224 = vadd.f32 %v1135, %v1215
        %v1225 = vadd.f32 %v1204, %v1219
        %v1227 = vlaneseq
        %v1228 = vshrl.u32 %v1227, 7
        %v1229 = vsub.s32 0, %v1228
        %v1230 = vrot.slane %v675, %v1229
        %v1231 = vlaneseq
        %v1232 = vshrl.u32 %v1231, 7
        %v1233 = vsub.s32 1, %v1232
        %v1234 = vrot.slane %v675, %v1233
        %v1235 = vlaneseq
        %v1236 = vshrl.u32 %v1235, 7
        %v1237 = vsub.s32 2, %v1236
        %v1238 = vrot.slane %v675, %v1237
        %1242 = vmatprep.subr.mxu0 %v432
        %1243 = vmatpush1.msra.mxu0 %v431
        %1244 = vmatprep.subr.mxu0 %v435
        %1245 = vmatpush1.msra.mxu0 %v434
        %1246 = vmatprep.subr.mxu0 %v438
        %1247 = vmatpush1.msra.mxu0 %v437
        %1248 = vmatprep.subr.mxu0 %v441
        %1249 = vmatpush1.msra.mxu0 %v440
        %1250 = vmatprep.subr.mxu0 %v444
        %1251 = vmatpush1.msra.mxu0 %v443
        %1252 = vmatprep.subr.mxu0 %v447
        %1253 = vmatpush1.msra.mxu0 %v446
        %1254 = vmatprep.subr.mxu0 %v450
        %1255 = vmatpush1.msra.mxu0 %v449
        %1256 = vmatprep.subr.mxu0 %v453
        %1257 = vmatpush1.msra.mxu0 %v452
        %1258 = vmatprep.subr.mxu0 %v456
        %1259 = vmatpush1.msra.mxu0 %v455
        %1260 = vmatprep.subr.mxu0 %v459
        %1261 = vmatpush1.msra.mxu0 %v458
        %1262 = vmatprep.subr.mxu0 %v462
        %1263 = vmatpush1.msra.mxu0 %v461
        %1264 = vmatprep.subr.mxu0 %v465
        %1265 = vmatpush1.msra.mxu0 %v464
        %1266 = vmatprep.subr.mxu0 %v468
        %1267 = vmatpush1.msra.mxu0 %v467
        %1268 = vmatprep.subr.mxu0 %v471
        %1269 = vmatpush1.msra.mxu0 %v470
        %1270 = vmatprep.subr.mxu0 %v474
        %1271 = vmatpush1.msra.mxu0 %v473
        %1272 = vmatprep.subr.mxu0 %v477
        %1273 = vmatpush1.msra.mxu0 %v476
        %1274 = vmatprep.subr.mxu0 0.0
        %1275 = vmatpush1.msra.mxu0 0.0
        %1276 = vmatprep.subr.mxu0 0.0
        %1277 = vmatpush1.msra.mxu0 0.0
        %1278 = vmatprep.subr.mxu0 0.0
        %1279 = vmatpush1.msra.mxu0 0.0
        %1280 = vmatprep.subr.mxu0 0.0
        %1281 = vmatpush1.msra.mxu0 0.0
        %1282 = vmatprep.subr.mxu0 0.0
        %1283 = vmatpush1.msra.mxu0 0.0
        %1284 = vmatprep.subr.mxu0 0.0
        %1285 = vmatpush1.msra.mxu0 0.0
        %1286 = vmatprep.subr.mxu0 0.0
        %1287 = vmatpush1.msra.mxu0 0.0
        %1288 = vmatprep.subr.mxu0 0.0
        %1289 = vmatpush1.msra.mxu0 0.0
        %1290 = vmatprep.subr.mxu0 0.0
        %1291 = vmatpush1.msra.mxu0 0.0
        %1292 = vmatprep.subr.mxu0 0.0
        %1293 = vmatpush1.msra.mxu0 0.0
        %1294 = vmatprep.subr.mxu0 0.0
        %1295 = vmatpush1.msra.mxu0 0.0
        %1296 = vmatprep.subr.mxu0 0.0
        %1297 = vmatpush1.msra.mxu0 0.0
        %1298 = vmatprep.subr.mxu0 0.0
        %1299 = vmatpush1.msra.mxu0 0.0
        %1300 = vmatprep.subr.mxu0 0.0
        %1301 = vmatpush1.msra.mxu0 0.0
        %1302 = vmatprep.subr.mxu0 0.0
        %1303 = vmatpush1.msra.mxu0 0.0
        %1304 = vmatprep.subr.mxu0 0.0
        %1305 = vmatpush1.msra.mxu0 0.0
        %1306 = vmatprep.mubr.f32.mxu0 0.0
        %1307 = vmatmul.mubr.f32.gmra.mrb[0].mxu0 %v683
        %v1308 = vpop.f32.mrb[0].mxu0
        %v1309 = vadd.f32 %v1230, %v1308
        %v1310 = vpop.f32.mrb[0].mxu0
        %v1311 = vadd.f32 %v1234, %v1310
        %1312 = vdwg.mxu0
        %1313 = vmatprep.subr.mxu0 0.0
        %1314 = vmatpush1.msra.mxu0 %v433
        %1315 = vmatprep.subr.mxu0 0.0
        %1316 = vmatpush1.msra.mxu0 %v436
        %1317 = vmatprep.subr.mxu0 0.0
        %1318 = vmatpush1.msra.mxu0 %v439
        %1319 = vmatprep.subr.mxu0 0.0
        %1320 = vmatpush1.msra.mxu0 %v442
        %1321 = vmatprep.subr.mxu0 0.0
        %1322 = vmatpush1.msra.mxu0 %v445
        %1323 = vmatprep.subr.mxu0 0.0
        %1324 = vmatpush1.msra.mxu0 %v448
        %1325 = vmatprep.subr.mxu0 0.0
        %1326 = vmatpush1.msra.mxu0 %v451
        %1327 = vmatprep.subr.mxu0 0.0
        %1328 = vmatpush1.msra.mxu0 %v454
        %1329 = vmatprep.subr.mxu0 0.0
        %1330 = vmatpush1.msra.mxu0 %v457
        %1331 = vmatprep.subr.mxu0 0.0
        %1332 = vmatpush1.msra.mxu0 %v460
        %1333 = vmatprep.subr.mxu0 0.0
        %1334 = vmatpush1.msra.mxu0 %v463
        %1335 = vmatprep.subr.mxu0 0.0
        %1336 = vmatpush1.msra.mxu0 %v466
        %1337 = vmatprep.subr.mxu0 0.0
        %1338 = vmatpush1.msra.mxu0 %v469
        %1339 = vmatprep.subr.mxu0 0.0
        %1340 = vmatpush1.msra.mxu0 %v472
        %1341 = vmatprep.subr.mxu0 0.0
        %1342 = vmatpush1.msra.mxu0 %v475
        %1343 = vmatprep.subr.mxu0 0.0
        %1344 = vmatpush1.msra.mxu0 %v478
        %1345 = vmatprep.subr.mxu0 0.0
        %1346 = vmatpush1.msra.mxu0 0.0
        %1347 = vmatprep.subr.mxu0 0.0
        %1348 = vmatpush1.msra.mxu0 0.0
        %1349 = vmatprep.subr.mxu0 0.0
        %1350 = vmatpush1.msra.mxu0 0.0
        %1351 = vmatprep.subr.mxu0 0.0
        %1352 = vmatpush1.msra.mxu0 0.0
        %1353 = vmatprep.subr.mxu0 0.0
        %1354 = vmatpush1.msra.mxu0 0.0
        %1355 = vmatprep.subr.mxu0 0.0
        %1356 = vmatpush1.msra.mxu0 0.0
        %1357 = vmatprep.subr.mxu0 0.0
        %1358 = vmatpush1.msra.mxu0 0.0
        %1359 = vmatprep.subr.mxu0 0.0
        %1360 = vmatpush1.msra.mxu0 0.0
        %1361 = vmatprep.subr.mxu0 0.0
        %1362 = vmatpush1.msra.mxu0 0.0
        %1363 = vmatprep.subr.mxu0 0.0
        %1364 = vmatpush1.msra.mxu0 0.0
        %1365 = vmatprep.subr.mxu0 0.0
        %1366 = vmatpush1.msra.mxu0 0.0
        %1367 = vmatprep.subr.mxu0 0.0
        %1368 = vmatpush1.msra.mxu0 0.0
        %1369 = vmatprep.subr.mxu0 0.0
        %1370 = vmatpush1.msra.mxu0 0.0
        %1371 = vmatprep.subr.mxu0 0.0
        %1372 = vmatpush1.msra.mxu0 0.0
        %1373 = vmatprep.subr.mxu0 0.0
        %1374 = vmatpush1.msra.mxu0 0.0
        %1375 = vmatprep.subr.mxu0 0.0
        %1376 = vmatpush1.msra.mxu0 0.0
        %1377 = vmatprep.mubr.f32.mxu0 0.0
        %1378 = vmatmul.mubr.f32.gmra.mrb[0].mxu0 %v683
        %v1379 = vpop.f32.mrb[0].mxu0
        %v1380 = vadd.f32 %v1238, %v1379
        %v1381 = vpop.f32.mrb[0].mxu0
        %1382 = vdwg.mxu0
        %v1383 = vadd.f32 %v1223, %v1309
        %v1384 = vadd.f32 %v1224, %v1311
        %v1385 = vxor.u32 %v1383, 2147483648
        %v1386 = vxor.u32 %v1384, 2147483648
        %v1387 = vmul.f32 %v1385, 1.442695
        %v1388 = vpow.pop %v1387
        %v1389 = vmul.f32 %v1386, 1.442695
        %v1390 = vpow.pop %v1389
        %v1391 = vadd.f32 %v1388, 1.0
        %v1392 = vadd.f32 %v1390, 1.0
        %v1393 = vrcp.pop %v1391
        %v1394 = vmul.f32 1.0, %v1393
        %v1395 = vrcp.pop %v1392
        %v1396 = vmul.f32 1.0, %v1395
        %v1397 = vmul.f32 %v1394, %v1380
        %v1398 = vadd.f32 %v1225, %v1397
        %v1399 = vtanh.pop %v1398
        %v1400 = vsub.f32 %v683, %v1399
        %v1401 = vmul.f32 %v1396, %v1400
        %v1402 = vadd.f32 %v1399, %v1401
        %v1404 = vlaneseq
        %v1405 = vshrl.u32 %v1404, 7
        %v1406 = vsub.s32 0, %v1405
        %v1407 = vrot.slane %v682, %v1406
        %v1409 = vsub.f32 %v1407, %v1402
        %v1410 = vadd.f32 %v1402, %v1409
        %1411 = vmatprep.subr.mxu0 0.0
        %1412 = vmatpush1.msra.mxu0 %v575
        %1413 = vmatprep.subr.mxu0 0.0
        %1414 = vmatpush1.msra.mxu0 %v576
        %1415 = vmatprep.subr.mxu0 0.0
        %1416 = vmatpush1.msra.mxu0 %v577
        %1417 = vmatprep.subr.mxu0 0.0
        %1418 = vmatpush1.msra.mxu0 %v578
        %1419 = vmatprep.subr.mxu0 0.0
        %1420 = vmatpush1.msra.mxu0 %v579
        %1421 = vmatprep.subr.mxu0 0.0
        %1422 = vmatpush1.msra.mxu0 %v580
        %1423 = vmatprep.subr.mxu0 0.0
        %1424 = vmatpush1.msra.mxu0 %v581
        %1425 = vmatprep.subr.mxu0 0.0
        %1426 = vmatpush1.msra.mxu0 %v582
        %1427 = vmatprep.subr.mxu0 0.0
        %1428 = vmatpush1.msra.mxu0 %v583
        %1429 = vmatprep.subr.mxu0 0.0
        %1430 = vmatpush1.msra.mxu0 %v584
        %1431 = vmatprep.subr.mxu0 0.0
        %1432 = vmatpush1.msra.mxu0 %v585
        %1433 = vmatprep.subr.mxu0 0.0
        %1434 = vmatpush1.msra.mxu0 %v586
        %1435 = vmatprep.subr.mxu0 0.0
        %1436 = vmatpush1.msra.mxu0 %v587
        %1437 = vmatprep.subr.mxu0 0.0
        %1438 = vmatpush1.msra.mxu0 %v588
        %1439 = vmatprep.subr.mxu0 0.0
        %1440 = vmatpush1.msra.mxu0 %v589
        %1441 = vmatprep.subr.mxu0 0.0
        %1442 = vmatpush1.msra.mxu0 %v590
        %1443 = vmatprep.subr.mxu0 0.0
        %1444 = vmatpush1.msra.mxu0 0.0
        %1445 = vmatprep.subr.mxu0 0.0
        %1446 = vmatpush1.msra.mxu0 0.0
        %1447 = vmatprep.subr.mxu0 0.0
        %1448 = vmatpush1.msra.mxu0 0.0
        %1449 = vmatprep.subr.mxu0 0.0
        %1450 = vmatpush1.msra.mxu0 0.0
        %1451 = vmatprep.subr.mxu0 0.0
        %1452 = vmatpush1.msra.mxu0 0.0
        %1453 = vmatprep.subr.mxu0 0.0
        %1454 = vmatpush1.msra.mxu0 0.0
        %1455 = vmatprep.subr.mxu0 0.0
        %1456 = vmatpush1.msra.mxu0 0.0
        %1457 = vmatprep.subr.mxu0 0.0
        %1458 = vmatpush1.msra.mxu0 0.0
        %1459 = vmatprep.subr.mxu0 0.0
        %1460 = vmatpush1.msra.mxu0 0.0
        %1461 = vmatprep.subr.mxu0 0.0
        %1462 = vmatpush1.msra.mxu0 0.0
        %1463 = vmatprep.subr.mxu0 0.0
        %1464 = vmatpush1.msra.mxu0 0.0
        %1465 = vmatprep.subr.mxu0 0.0
        %1466 = vmatpush1.msra.mxu0 0.0
        %1467 = vmatprep.subr.mxu0 0.0
        %1468 = vmatpush1.msra.mxu0 0.0
        %1469 = vmatprep.subr.mxu0 0.0
        %1470 = vmatpush1.msra.mxu0 0.0
        %1471 = vmatprep.subr.mxu0 0.0
        %1472 = vmatpush1.msra.mxu0 0.0
        %1473 = vmatprep.subr.mxu0 0.0
        %1474 = vmatpush1.msra.mxu0 0.0
        %1475 = vmatprep.mubr.f32.mxu0 0.0
        %1476 = vmatmul.mubr.f32.gmra.mrb[0].mxu0 %v682
        %v1477 = vpop.f32.mrb[0].mxu0
        %v1478 = vadd.f32 %v676, %v1477
        %v1479 = vpop.f32.mrb[0].mxu0
        %1480 = vdwg.mxu0
        %v1482 = vlaneseq
        %v1483 = vshrl.u32 %v1482, 7
        %v1484 = vsub.s32 0, %v1483
        %v1485 = vrot.slane %v677, %v1484
        %v1486 = vlaneseq
        %v1487 = vshrl.u32 %v1486, 7
        %v1488 = vsub.s32 1, %v1487
        %v1489 = vrot.slane %v677, %v1488
        %1492 = vmatprep.subr.mxu0 %v592
        %1493 = vmatpush1.msra.mxu0 %v591
        %1494 = vmatprep.subr.mxu0 %v594
        %1495 = vmatpush1.msra.mxu0 %v593
        %1496 = vmatprep.subr.mxu0 %v596
        %1497 = vmatpush1.msra.mxu0 %v595
        %1498 = vmatprep.subr.mxu0 %v598
        %1499 = vmatpush1.msra.mxu0 %v597
        %1500 = vmatprep.subr.mxu0 %v600
        %1501 = vmatpush1.msra.mxu0 %v599
        %1502 = vmatprep.subr.mxu0 %v602
        %1503 = vmatpush1.msra.mxu0 %v601
        %1504 = vmatprep.subr.mxu0 %v604
        %1505 = vmatpush1.msra.mxu0 %v603
        %1506 = vmatprep.subr.mxu0 %v606
        %1507 = vmatpush1.msra.mxu0 %v605
        %1508 = vmatprep.subr.mxu0 %v608
        %1509 = vmatpush1.msra.mxu0 %v607
        %1510 = vmatprep.subr.mxu0 %v610
        %1511 = vmatpush1.msra.mxu0 %v609
        %1512 = vmatprep.subr.mxu0 %v612
        %1513 = vmatpush1.msra.mxu0 %v611
        %1514 = vmatprep.subr.mxu0 %v614
        %1515 = vmatpush1.msra.mxu0 %v613
        %1516 = vmatprep.subr.mxu0 %v616
        %1517 = vmatpush1.msra.mxu0 %v615
        %1518 = vmatprep.subr.mxu0 %v618
        %1519 = vmatpush1.msra.mxu0 %v617
        %1520 = vmatprep.subr.mxu0 %v620
        %1521 = vmatpush1.msra.mxu0 %v619
        %1522 = vmatprep.subr.mxu0 %v622
        %1523 = vmatpush1.msra.mxu0 %v621
        %1524 = vmatprep.subr.mxu0 0.0
        %1525 = vmatpush1.msra.mxu0 0.0
        %1526 = vmatprep.subr.mxu0 0.0
        %1527 = vmatpush1.msra.mxu0 0.0
        %1528 = vmatprep.subr.mxu0 0.0
        %1529 = vmatpush1.msra.mxu0 0.0
        %1530 = vmatprep.subr.mxu0 0.0
        %1531 = vmatpush1.msra.mxu0 0.0
        %1532 = vmatprep.subr.mxu0 0.0
        %1533 = vmatpush1.msra.mxu0 0.0
        %1534 = vmatprep.subr.mxu0 0.0
        %1535 = vmatpush1.msra.mxu0 0.0
        %1536 = vmatprep.subr.mxu0 0.0
        %1537 = vmatpush1.msra.mxu0 0.0
        %1538 = vmatprep.subr.mxu0 0.0
        %1539 = vmatpush1.msra.mxu0 0.0
        %1540 = vmatprep.subr.mxu0 0.0
        %1541 = vmatpush1.msra.mxu0 0.0
        %1542 = vmatprep.subr.mxu0 0.0
        %1543 = vmatpush1.msra.mxu0 0.0
        %1544 = vmatprep.subr.mxu0 0.0
        %1545 = vmatpush1.msra.mxu0 0.0
        %1546 = vmatprep.subr.mxu0 0.0
        %1547 = vmatpush1.msra.mxu0 0.0
        %1548 = vmatprep.subr.mxu0 0.0
        %1549 = vmatpush1.msra.mxu0 0.0
        %1550 = vmatprep.subr.mxu0 0.0
        %1551 = vmatpush1.msra.mxu0 0.0
        %1552 = vmatprep.subr.mxu0 0.0
        %1553 = vmatpush1.msra.mxu0 0.0
        %1554 = vmatprep.subr.mxu0 0.0
        %1555 = vmatpush1.msra.mxu0 0.0
        %1556 = vmatprep.mubr.f32.mxu0 0.0
        %1557 = vmatmul.mubr.f32.gmra.mrb[0].mxu0 %v1410
        %v1558 = vpop.f32.mrb[0].mxu0
        %v1559 = vadd.f32 %v1485, %v1558
        %v1560 = vpop.f32.mrb[0].mxu0
        %v1561 = vadd.f32 %v1489, %v1560
        %1562 = vdwg.mxu0
        %v1563 = vlaneseq
        %v1564 = vshrl.u32 %v1563, 7
        %v1565 = vsub.s32 0, %v1564
        %v1566 = vrot.slane %v1478, %v1565
        %v1567 = vmul.f32 %v1566, %v1559
        %1568 = vadd.xlane.f32.xlu0 %v1567
        %v1569 = vpop.xlane.xlu0 %1568
        %v1570 = vmul.f32 %v1569, 0.17677669
        %v1572 = vrot.slane %v1570, 1
        %v1574 = vmax.f32 %v1570, %v1572
        %v1575 = vrot.slane %v1570, 2
        %v1577 = vmax.f32 %v1574, %v1575
        %v1578 = vrot.slane %v1570, 3
        %v1580 = vmax.f32 %v1577, %v1578
        %v1581 = vrot.slane %v1570, 4
        %v1583 = vmax.f32 %v1580, %v1581
        %v1584 = vrot.slane %v1570, 5
        %v1586 = vmax.f32 %v1583, %v1584
        %v1587 = vrot.slane %v1570, 6
        %v1589 = vmax.f32 %v1586, %v1587
        %v1590 = vrot.slane %v1570, 7
        %v1592 = vmax.f32 %v1589, %v1590
        %v1593 = vlaneseq
        %v1594 = vshrl.u32 %v1593, 7
        %v1595 = vsub.s32 0, %v1594
        %v1596 = vrot.slane %v1592, %v1595
        %v1597 = vsub.f32 %v1570, %v1596
        %v1598 = vmul.f32 %v1597, 1.442695
        %v1599 = vpow.pop %v1598
        %v1601 = vrot.slane %v1599, 1
        %v1603 = vadd.f32 %v1599, %v1601
        %v1604 = vrot.slane %v1599, 2
        %v1606 = vadd.f32 %v1603, %v1604
        %v1607 = vrot.slane %v1599, 3
        %v1609 = vadd.f32 %v1606, %v1607
        %v1610 = vrot.slane %v1599, 4
        %v1612 = vadd.f32 %v1609, %v1610
        %v1613 = vrot.slane %v1599, 5
        %v1615 = vadd.f32 %v1612, %v1613
        %v1616 = vrot.slane %v1599, 6
        %v1618 = vadd.f32 %v1615, %v1616
        %v1619 = vrot.slane %v1599, 7
        %v1621 = vadd.f32 %v1618, %v1619
        %v1622 = vlaneseq
        %v1623 = vshrl.u32 %v1622, 7
        %v1624 = vsub.s32 0, %v1623
        %v1625 = vrot.slane %v1621, %v1624
        %v1626 = vrcp.pop %v1625
        %v1627 = vmul.f32 %v1599, %v1626
        %1629 = vset.pattern.permute.xlu0 0
        %1630 = vperm.xlu0 %1629, %v1627
        %v1631 = vpop.permute.xlu0 %1630
        %v1633 = vmul.f32 %v1631, %v1561
        %v1635 = vrot.slane %v1633, 1
        %v1637 = vadd.f32 %v1633, %v1635
        %v1638 = vrot.slane %v1633, 2
        %v1640 = vadd.f32 %v1637, %v1638
        %v1641 = vrot.slane %v1633, 3
        %v1643 = vadd.f32 %v1640, %v1641
        %v1644 = vrot.slane %v1633, 4
        %v1646 = vadd.f32 %v1643, %v1644
        %v1647 = vrot.slane %v1633, 5
        %v1649 = vadd.f32 %v1646, %v1647
        %v1650 = vrot.slane %v1633, 6
        %v1652 = vadd.f32 %v1649, %v1650
        %v1653 = vrot.slane %v1633, 7
        %v1655 = vadd.f32 %v1652, %v1653
        %1656 = vmatprep.subr.mxu0 0.0
        %1657 = vmatpush1.msra.mxu0 %v623
        %1658 = vmatprep.subr.mxu0 0.0
        %1659 = vmatpush1.msra.mxu0 %v624
        %1660 = vmatprep.subr.mxu0 0.0
        %1661 = vmatpush1.msra.mxu0 %v625
        %1662 = vmatprep.subr.mxu0 0.0
        %1663 = vmatpush1.msra.mxu0 %v626
        %1664 = vmatprep.subr.mxu0 0.0
        %1665 = vmatpush1.msra.mxu0 %v627
        %1666 = vmatprep.subr.mxu0 0.0
        %1667 = vmatpush1.msra.mxu0 %v628
        %1668 = vmatprep.subr.mxu0 0.0
        %1669 = vmatpush1.msra.mxu0 %v629
        %1670 = vmatprep.subr.mxu0 0.0
        %1671 = vmatpush1.msra.mxu0 %v630
        %1672 = vmatprep.subr.mxu0 0.0
        %1673 = vmatpush1.msra.mxu0 %v631
        %1674 = vmatprep.subr.mxu0 0.0
        %1675 = vmatpush1.msra.mxu0 %v632
        %1676 = vmatprep.subr.mxu0 0.0
        %1677 = vmatpush1.msra.mxu0 %v633
        %1678 = vmatprep.subr.mxu0 0.0
        %1679 = vmatpush1.msra.mxu0 %v634
        %1680 = vmatprep.subr.mxu0 0.0
        %1681 = vmatpush1.msra.mxu0 %v635
        %1682 = vmatprep.subr.mxu0 0.0
        %1683 = vmatpush1.msra.mxu0 %v636
        %1684 = vmatprep.subr.mxu0 0.0
        %1685 = vmatpush1.msra.mxu0 %v637
        %1686 = vmatprep.subr.mxu0 0.0
        %1687 = vmatpush1.msra.mxu0 %v638
        %1688 = vmatprep.subr.mxu0 0.0
        %1689 = vmatpush1.msra.mxu0 0.0
        %1690 = vmatprep.subr.mxu0 0.0
        %1691 = vmatpush1.msra.mxu0 0.0
        %1692 = vmatprep.subr.mxu0 0.0
        %1693 = vmatpush1.msra.mxu0 0.0
        %1694 = vmatprep.subr.mxu0 0.0
        %1695 = vmatpush1.msra.mxu0 0.0
        %1696 = vmatprep.subr.mxu0 0.0
        %1697 = vmatpush1.msra.mxu0 0.0
        %1698 = vmatprep.subr.mxu0 0.0
        %1699 = vmatpush1.msra.mxu0 0.0
        %1700 = vmatprep.subr.mxu0 0.0
        %1701 = vmatpush1.msra.mxu0 0.0
        %1702 = vmatprep.subr.mxu0 0.0
        %1703 = vmatpush1.msra.mxu0 0.0
        %1704 = vmatprep.subr.mxu0 0.0
        %1705 = vmatpush1.msra.mxu0 0.0
        %1706 = vmatprep.subr.mxu0 0.0
        %1707 = vmatpush1.msra.mxu0 0.0
        %1708 = vmatprep.subr.mxu0 0.0
        %1709 = vmatpush1.msra.mxu0 0.0
        %1710 = vmatprep.subr.mxu0 0.0
        %1711 = vmatpush1.msra.mxu0 0.0
        %1712 = vmatprep.subr.mxu0 0.0
        %1713 = vmatpush1.msra.mxu0 0.0
        %1714 = vmatprep.subr.mxu0 0.0
        %1715 = vmatpush1.msra.mxu0 0.0
        %1716 = vmatprep.subr.mxu0 0.0
        %1717 = vmatpush1.msra.mxu0 0.0
        %1718 = vmatprep.subr.mxu0 0.0
        %1719 = vmatpush1.msra.mxu0 0.0
        %1720 = vmatprep.mubr.f32.mxu0 0.0
        %1721 = vmatmul.mubr.f32.gmra.mrb[0].mxu0 %v1655
        %v1722 = vpop.f32.mrb[0].mxu0
        %v1723 = vadd.f32 %v678, %v1722
        %v1724 = vpop.f32.mrb[0].mxu0
        %1725 = vdwg.mxu0
        %1726 = vmatprep.subr.mxu0 0.0
        %1727 = vmatpush1.msra.mxu0 %v655
        %1728 = vmatprep.subr.mxu0 0.0
        %1729 = vmatpush1.msra.mxu0 %v656
        %1730 = vmatprep.subr.mxu0 0.0
        %1731 = vmatpush1.msra.mxu0 %v657
        %1732 = vmatprep.subr.mxu0 0.0
        %1733 = vmatpush1.msra.mxu0 %v658
        %1734 = vmatprep.subr.mxu0 0.0
        %1735 = vmatpush1.msra.mxu0 %v659
        %1736 = vmatprep.subr.mxu0 0.0
        %1737 = vmatpush1.msra.mxu0 %v660
        %1738 = vmatprep.subr.mxu0 0.0
        %1739 = vmatpush1.msra.mxu0 %v661
        %1740 = vmatprep.subr.mxu0 0.0
        %1741 = vmatpush1.msra.mxu0 %v662
        %1742 = vmatprep.subr.mxu0 0.0
        %1743 = vmatpush1.msra.mxu0 %v663
        %1744 = vmatprep.subr.mxu0 0.0
        %1745 = vmatpush1.msra.mxu0 %v664
        %1746 = vmatprep.subr.mxu0 0.0
        %1747 = vmatpush1.msra.mxu0 %v665
        %1748 = vmatprep.subr.mxu0 0.0
        %1749 = vmatpush1.msra.mxu0 %v666
        %1750 = vmatprep.subr.mxu0 0.0
        %1751 = vmatpush1.msra.mxu0 %v667
        %1752 = vmatprep.subr.mxu0 0.0
        %1753 = vmatpush1.msra.mxu0 %v668
        %1754 = vmatprep.subr.mxu0 0.0
        %1755 = vmatpush1.msra.mxu0 %v669
        %1756 = vmatprep.subr.mxu0 0.0
        %1757 = vmatpush1.msra.mxu0 %v670
        %1758 = vmatprep.subr.mxu0 0.0
        %1759 = vmatpush1.msra.mxu0 0.0
        %1760 = vmatprep.subr.mxu0 0.0
        %1761 = vmatpush1.msra.mxu0 0.0
        %1762 = vmatprep.subr.mxu0 0.0
        %1763 = vmatpush1.msra.mxu0 0.0
        %1764 = vmatprep.subr.mxu0 0.0
        %1765 = vmatpush1.msra.mxu0 0.0
        %1766 = vmatprep.subr.mxu0 0.0
        %1767 = vmatpush1.msra.mxu0 0.0
        %1768 = vmatprep.subr.mxu0 0.0
        %1769 = vmatpush1.msra.mxu0 0.0
        %1770 = vmatprep.subr.mxu0 0.0
        %1771 = vmatpush1.msra.mxu0 0.0
        %1772 = vmatprep.subr.mxu0 0.0
        %1773 = vmatpush1.msra.mxu0 0.0
        %1774 = vmatprep.subr.mxu0 0.0
        %1775 = vmatpush1.msra.mxu0 0.0
        %1776 = vmatprep.subr.mxu0 0.0
        %1777 = vmatpush1.msra.mxu0 0.0
        %1778 = vmatprep.subr.mxu0 0.0
        %1779 = vmatpush1.msra.mxu0 0.0
        %1780 = vmatprep.subr.mxu0 0.0
        %1781 = vmatpush1.msra.mxu0 0.0
        %1782 = vmatprep.subr.mxu0 0.0
        %1783 = vmatpush1.msra.mxu0 0.0
        %1784 = vmatprep.subr.mxu0 0.0
        %1785 = vmatpush1.msra.mxu0 0.0
        %1786 = vmatprep.subr.mxu0 0.0
        %1787 = vmatpush1.msra.mxu0 0.0
        %1788 = vmatprep.subr.mxu0 0.0
        %1789 = vmatpush1.msra.mxu0 0.0
        %1790 = vmatprep.mubr.f32.mxu0 0.0
        %1791 = vmatmul.mubr.f32.gmra.mrb[0].mxu0 %v1410
        %v1792 = vpop.f32.mrb[0].mxu0
        %v1793 = vadd.f32 0.0, %v1792
        %v1794 = vpop.f32.mrb[0].mxu0
        %1795 = vdwg.mxu0
        %1796 = vmatprep.subr.mxu0 0.0
        %1797 = vmatpush1.msra.mxu0 %v639
        %1798 = vmatprep.subr.mxu0 0.0
        %1799 = vmatpush1.msra.mxu0 %v640
        %1800 = vmatprep.subr.mxu0 0.0
        %1801 = vmatpush1.msra.mxu0 %v641
        %1802 = vmatprep.subr.mxu0 0.0
        %1803 = vmatpush1.msra.mxu0 %v642
        %1804 = vmatprep.subr.mxu0 0.0
        %1805 = vmatpush1.msra.mxu0 %v643
        %1806 = vmatprep.subr.mxu0 0.0
        %1807 = vmatpush1.msra.mxu0 %v644
        %1808 = vmatprep.subr.mxu0 0.0
        %1809 = vmatpush1.msra.mxu0 %v645
        %1810 = vmatprep.subr.mxu0 0.0
        %1811 = vmatpush1.msra.mxu0 %v646
        %1812 = vmatprep.subr.mxu0 0.0
        %1813 = vmatpush1.msra.mxu0 %v647
        %1814 = vmatprep.subr.mxu0 0.0
        %1815 = vmatpush1.msra.mxu0 %v648
        %1816 = vmatprep.subr.mxu0 0.0
        %1817 = vmatpush1.msra.mxu0 %v649
        %1818 = vmatprep.subr.mxu0 0.0
        %1819 = vmatpush1.msra.mxu0 %v650
        %1820 = vmatprep.subr.mxu0 0.0
        %1821 = vmatpush1.msra.mxu0 %v651
        %1822 = vmatprep.subr.mxu0 0.0
        %1823 = vmatpush1.msra.mxu0 %v652
        %1824 = vmatprep.subr.mxu0 0.0
        %1825 = vmatpush1.msra.mxu0 %v653
        %1826 = vmatprep.subr.mxu0 0.0
        %1827 = vmatpush1.msra.mxu0 %v654
        %1828 = vmatprep.subr.mxu0 0.0
        %1829 = vmatpush1.msra.mxu0 0.0
        %1830 = vmatprep.subr.mxu0 0.0
        %1831 = vmatpush1.msra.mxu0 0.0
        %1832 = vmatprep.subr.mxu0 0.0
        %1833 = vmatpush1.msra.mxu0 0.0
        %1834 = vmatprep.subr.mxu0 0.0
        %1835 = vmatpush1.msra.mxu0 0.0
        %1836 = vmatprep.subr.mxu0 0.0
        %1837 = vmatpush1.msra.mxu0 0.0
        %1838 = vmatprep.subr.mxu0 0.0
        %1839 = vmatpush1.msra.mxu0 0.0
        %1840 = vmatprep.subr.mxu0 0.0
        %1841 = vmatpush1.msra.mxu0 0.0
        %1842 = vmatprep.subr.mxu0 0.0
        %1843 = vmatpush1.msra.mxu0 0.0
        %1844 = vmatprep.subr.mxu0 0.0
        %1845 = vmatpush1.msra.mxu0 0.0
        %1846 = vmatprep.subr.mxu0 0.0
        %1847 = vmatpush1.msra.mxu0 0.0
        %1848 = vmatprep.subr.mxu0 0.0
        %1849 = vmatpush1.msra.mxu0 0.0
        %1850 = vmatprep.subr.mxu0 0.0
        %1851 = vmatpush1.msra.mxu0 0.0
        %1852 = vmatprep.subr.mxu0 0.0
        %1853 = vmatpush1.msra.mxu0 0.0
        %1854 = vmatprep.subr.mxu0 0.0
        %1855 = vmatpush1.msra.mxu0 0.0
        %1856 = vmatprep.subr.mxu0 0.0
        %1857 = vmatpush1.msra.mxu0 0.0
        %1858 = vmatprep.subr.mxu0 0.0
        %1859 = vmatpush1.msra.mxu0 0.0
        %1860 = vmatprep.mubr.f32.mxu0 0.0
        %1861 = vmatmul.mubr.f32.gmra.mrb[0].mxu0 %v683
        %v1862 = vpop.f32.mrb[0].mxu0
        %v1863 = vadd.f32 %v1793, %v1862
        %v1864 = vpop.f32.mrb[0].mxu0
        %1865 = vdwg.mxu0
        %v1867 = vlaneseq
        %v1868 = vshrl.u32 %v1867, 7
        %v1869 = vsub.s32 0, %v1868
        %v1870 = vrot.slane %v679, %v1869
        %v1872 = vadd.f32 %v1863, %v1870
        %v1873 = vxor.u32 %v1872, 2147483648
        %v1874 = vmul.f32 %v1873, 1.442695
        %v1875 = vpow.pop %v1874
        %v1876 = vadd.f32 %v1875, 1.0
        %v1877 = vrcp.pop %v1876
        %v1878 = vmul.f32 1.0, %v1877
        %v1879 = vsub.f32 %v683, %v1410
        %v1880 = vmul.f32 %v1878, %v1879
        %v1881 = vadd.f32 %v1410, %v1880
        %1882 = vst [vmem:[%s384] sm:$0xff] %v1881
        %1883 = vst [vmem:[%s390] sm:$0x1] %v1723
        %s1884 = sand.u32 %s186, 1
        %s1885 = scalar_lea.sflag [#allocation4], %s1884
        %s1886 = sand.u32 %s186, 1
        %s1887 = smul.addr %s1886, 8
        %s1888 = scalar_lea.vmem [#allocation10], %s1887
        %s1889 = sand.u32 %s212, 1
        %s1890 = scalar_lea.sflag [#allocation12], %s1889
        %s1891 = sand.u32 %s212, 1
        %s1892 = scalar_lea.vmem [#allocation11], %s1891
        // Predicated region
        $region61: #{tpu_custom_call.1} parent=43 // pred_check
          %p1893 = pneg %p196
        $region62: #{tpu_custom_call.1} parent=43 // pred_check_branch
          %1895 = sbr.rel (%p1893) target = $region64
        $region63: #{tpu_custom_call.1} parent=43 // pred_region
          %s1897 = ssub.s32 128, 128
          %1898 = vsyncadd %s1885, %s1897
          %s1899 = smul.addr %s32, 128
          %s1900 = scalar_lea.hbm %s6, %s1899
          %s1902 = sshll.u32 %s1888, 4
          %s1903 = int_to_ptr.vmem [resolvable:$true] %s1902
          %1905 = dma.vmem_to_hbm [thread:$0]  %s1903, 128, %s1900, %s1885
        $region64: #{tpu_custom_call.1} parent=43 // pred_fallthru
          _
        // Predicated region
        $region65: #{tpu_custom_call.1} parent=43 // pred_check
          %p1906 = pneg %p222
        $region66: #{tpu_custom_call.1} parent=43 // pred_check_branch
          %1908 = sbr.rel (%p1906) target = $region68
        $region67: #{tpu_custom_call.1} parent=43 // pred_region
          %s1910 = ssub.s32 16, 16
          %1911 = vsyncadd %s1890, %s1910
          %s1912 = smul.addr %s32, 16
          %s1913 = scalar_lea.hbm %s7, %s1912
          %s1915 = sshll.u32 %s1892, 4
          %s1916 = int_to_ptr.vmem [resolvable:$true] %s1915
          %1918 = dma.vmem_to_hbm [thread:$0]  %s1916, 16, %s1913, %s1890
        $region68: #{tpu_custom_call.1} parent=43 // pred_fallthru
          _
      $region44: #{tpu_custom_call.1} parent=5 // pred_fallthru
        _
      %p1919 = scmp.le.s32.totalorder 2, %s27
      // Predicated region
      $region69: #{tpu_custom_call.1} parent=5 // pred_check
        %p1920 = pneg %p1919
      $region70: #{tpu_custom_call.1} parent=5 // pred_check_branch
        %1922 = sbr.rel (%p1920) target = $region72
      $region71: #{tpu_custom_call.1} parent=5 // pred_region
        %s1923 = ssub.s32 %s27, 2
        // Predicated region
        $region73: #{tpu_custom_call.1} parent=71 // pred_check
          %p1924 = pneg %p202
        $region74: #{tpu_custom_call.1} parent=71 // pred_check_branch
          %1926 = sbr.rel (%p1924) target = $region76
        $region75: #{tpu_custom_call.1} parent=71 // pred_region
          %s1927 = sand.u32 %s187, 1
          %s1928 = scalar_lea.sflag [#allocation4], %s1927
          %s1929 = sand.u32 %s187, 1
          %s1930 = smul.addr %s1929, 8
          %s1931 = scalar_lea.vmem [#allocation10], %s1930
          %1932 = dma.done %s1928, 128
        $region76: #{tpu_custom_call.1} parent=71 // pred_fallthru
          _
        // Predicated region
        $region77: #{tpu_custom_call.1} parent=71 // pred_check
          %p1933 = pneg %p228
        $region78: #{tpu_custom_call.1} parent=71 // pred_check_branch
          %1935 = sbr.rel (%p1933) target = $region80
        $region79: #{tpu_custom_call.1} parent=71 // pred_region
          %s1936 = sand.u32 %s213, 1
          %s1937 = scalar_lea.sflag [#allocation12], %s1936
          %s1938 = sand.u32 %s213, 1
          %s1939 = scalar_lea.vmem [#allocation11], %s1938
          %1940 = dma.done %s1937, 16
        $region80: #{tpu_custom_call.1} parent=71 // pred_fallthru
          _
      $region72: #{tpu_custom_call.1} parent=5 // pred_fallthru
        _
    $region6: #{tpu_custom_call.1} parent=1 // loop_footer
      %s31 = sadd.s32 1, %s27
    $region7: #{tpu_custom_call.1} parent=1 // loop_footer_branch
      %26 = sbr.rel target = $region3
    $region8: #{tpu_custom_call.1} parent=1 // loop_exit
      _
    %1941 = vsyncpa [#allocation3], 1
    %s1942 = scalar_lea.sflag [#allocation3], 1
    %1943 = vsyncpa %s1942, 1
    %1944 = vsyncpa [#allocation6], 1
    %s1945 = scalar_lea.sflag [#allocation6], 1
    %1946 = vsyncpa %s1945, 1
    %1947 = vsyncpa [#allocation9], 1
    %1948 = vsyncpa [#allocation4], 1
    %s1949 = scalar_lea.sflag [#allocation4], 1
    %1950 = vsyncpa %s1949, 1
    %1951 = vsyncpa [#allocation12], 1
    %s1952 = scalar_lea.sflag [#allocation12], 1
    %1953 = vsyncpa %s1952, 1

</llo_original>
